<compile_context>
chip_gen: v7x
topology: tpu7x:2x2x1
jax: 0.10.0
libtpu: 0.0.40
codegen_flags: <defaults>
</compile_context>

<pallas_src>
import functools
import math

import jax
import jax.numpy as jnp
from jax import lax
from jax.experimental import pallas as pl
from jax.experimental.pallas import tpu as pltpu


def _mhsa_kernel(n_head_steps, heads_per_step, head_dim, tiled_q,
                 compute_dtype, approx_recip, *refs):
    if tiled_q:
        xq_ref, xkv_ref = refs[0], refs[1]
        refs = refs[2:]
    else:
        xkv_ref = refs[0]
        xq_ref = xkv_ref
        refs = refs[1:]
    (wq_ref, wk_ref, wv_ref, wo_ref,
     bq_ref, bk_ref, bv_ref, bo_ref, o_ref, acc_ref) = refs[:10]
    if tiled_q:
        kcache_ref, vcache_ref = refs[10], refs[11]

    qi = pl.program_id(1)
    hstep = pl.program_id(2)

    @pl.when(hstep == 0)
    def _init():
        acc_ref[...] = jnp.zeros_like(acc_ref)

    wq = wq_ref[0]          # (E, hps*D) compute_dtype, 1/sqrt(D) pre-folded
    wk = wk_ref[0]          # (E, hps*D)
    wv = wv_ref[0]          # (E, hps*D)
    wo = wo_ref[0]          # (hps*D, E)

    # Wide (all heads of this step) query projection for this query tile.
    q = (jnp.dot(xq_ref[0], wq, preferred_element_type=jnp.float32)
         + bq_ref[0]).astype(compute_dtype)                         # (TQ, hps*D)

    def _project_kv():
        x_kv = xkv_ref[0]                                           # (S, E)
        k_new = (jnp.dot(x_kv, wk, preferred_element_type=jnp.float32)
                 + bk_ref[0]).astype(compute_dtype)                 # (S, hps*D)
        v_new = (jnp.dot(x_kv, wv, preferred_element_type=jnp.float32)
                 + bv_ref[0]).astype(compute_dtype)                 # (S, hps*D)
        return k_new, v_new

    if tiled_q:
        # K/V for this head group are computed once per batch element (qi == 0)
        # and reused for the remaining query tiles.
        @pl.when(qi == 0)
        def _fill_cache():
            k_new, v_new = _project_kv()
            kcache_ref[hstep] = k_new
            vcache_ref[hstep] = v_new

        k = kcache_ref[hstep]
        v = vcache_ref[hstep]
    else:
        k, v = _project_kv()

    D = head_dim
    for i in range(heads_per_step):
        sl = slice(i * D, (i + 1) * D)
        q_h, k_h, v_h = q[:, sl], k[:, sl], v[:, sl]

        # Scores: contract over head_dim (no explicit K transpose / XLU work).
        s = lax.dot_general(q_h, k_h, (((1,), (1,)), ((), ())),
                            preferred_element_type=jnp.float32)     # (TQ, S)

        # Numerically stable softmax; divide deferred to the context rows.
        m = jnp.max(s, axis=-1, keepdims=True)
        p = jnp.exp(s - m)                                          # f32 (v5e-safe)
        l = jnp.sum(p, axis=-1, keepdims=True)                      # (TQ, 1)

        ctx = jnp.dot(p.astype(compute_dtype), v_h,
                      preferred_element_type=jnp.float32)           # (TQ, D)
        inv_l = pl.reciprocal(l, approx=True) if approx_recip else 1.0 / l
        ctx = ctx * inv_l

        # This head's contribution to the output projection.
        acc_ref[...] += jnp.dot(ctx.astype(compute_dtype), wo[sl, :],
                                preferred_element_type=jnp.float32)  # (TQ, E)

    @pl.when(hstep == n_head_steps - 1)
    def _store():
        o_ref[0] = (acc_ref[...] + bo_ref[...]).astype(o_ref.dtype)


def multi_head_self_attention(x, params, num_heads, *,
                              max_q_tile=256,
                              lane_target=256,
                              compute_dtype=jnp.bfloat16,
                              approx_recip=True,
                              kv_buffer_count=None,
                              vmem_limit_bytes=48 * 1024 * 1024):
    """x: (B, S, E) float32; params: dict of (E, E) weights and (1, E) biases.

    Weights are stored so that y = x @ W + b (i.e. W == torch_linear.weight.T).
    """
    B, S, E = x.shape
    assert E % num_heads == 0, "`embedding_dim` must be divisible by `num_heads`."
    D = E // num_heads

    # --- Query tiling: largest divisor of S that is <= max_q_tile and % 8 == 0.
    if S <= max_q_tile:
        TQ = S
    else:
        divs = [t for t in range(8, max_q_tile + 1, 8) if S % t == 0]
        TQ = max(divs) if divs else S   # correctness-preserving fallback (VMEM-heavy)
    num_q_tiles = S // TQ
    tiled_q = num_q_tiles > 1

    # --- Heads per grid step: widen matmul N toward the MXU width (256 / 128).
    cands = [d for d in range(1, num_heads + 1)
             if num_heads % d == 0 and d * D <= lane_target]
    hps = max(cands) if cands else 1
    n_hsteps = num_heads // hps
    HD = hps * D

    scale = 1.0 / math.sqrt(D)

    # Host-side, one-off weight rearrangement: head-step-major wide slabs (so
    # the kernel never lane-slices weights and each DMA is lane-dense), scale
    # folded into Wq/bq, MXU operands pre-cast to compute_dtype, biases f32.
    wq = (params["wq"] * scale).reshape(E, n_hsteps, HD).transpose(1, 0, 2)  # (nh, E, HD)
    wk = params["wk"].reshape(E, n_hsteps, HD).transpose(1, 0, 2)            # (nh, E, HD)
    wv = params["wv"].reshape(E, n_hsteps, HD).transpose(1, 0, 2)            # (nh, E, HD)
    wo = params["wo"].reshape(n_hsteps, HD, E)                               # (nh, HD, E)
    wq, wk, wv, wo = (w.astype(compute_dtype) for w in (wq, wk, wv, wo))
    bq = (params["bq"] * scale).reshape(n_hsteps, 1, HD)                     # (nh, 1, HD)
    bk = params["bk"].reshape(n_hsteps, 1, HD)
    bv = params["bv"].reshape(n_hsteps, 1, HD)
    bo = params["bo"]                                                        # (1, E)
    x_c = x.astype(compute_dtype)

    kernel = functools.partial(_mhsa_kernel, n_hsteps, hps, D, tiled_q,
                               compute_dtype, approx_recip)

    w_in_spec = pl.BlockSpec((1, E, HD), lambda b, qi, h: (h, 0, 0))
    w_out_spec = pl.BlockSpec((1, HD, E), lambda b, qi, h: (h, 0, 0))
    b_spec = pl.BlockSpec((1, 1, HD), lambda b, qi, h: (h, 0, 0))
    bo_spec = pl.BlockSpec((1, E), lambda b, qi, h: (0, 0))

    xq_spec = pl.BlockSpec((1, TQ, E), lambda b, qi, h: (b, qi, 0))
    # Optional single-buffering of the per-batch x_kv slab (VMEM-tight v7x).
    xkv_kwargs = ({"pipeline_mode": pl.Buffered(kv_buffer_count)}
                  if kv_buffer_count is not None else {})
    xkv_spec = pl.BlockSpec((1, S, E), lambda b, qi, h: (b, 0, 0), **xkv_kwargs)

    in_specs, args = [], []
    if tiled_q:
        in_specs += [xq_spec, xkv_spec]
        args += [x_c, x_c]
    else:
        in_specs += [xkv_spec]
        args += [x_c]
    in_specs += [w_in_spec, w_in_spec, w_in_spec, w_out_spec,
                 b_spec, b_spec, b_spec, bo_spec]
    args += [wq, wk, wv, wo, bq, bk, bv, bo]

    scratch_shapes = [pltpu.VMEM((TQ, E), jnp.float32)]
    if tiled_q:
        scratch_shapes += [pltpu.VMEM((n_hsteps, S, HD), compute_dtype),
                           pltpu.VMEM((n_hsteps, S, HD), compute_dtype)]

    # Advisory cost hint (counts the per-(b, qi) weight re-fetch traffic too).
    w_bytes = jnp.finfo(compute_dtype).bits // 8
    flops = B * (8 * S * E * E + 4 * S * S * E)
    transcendentals = B * num_heads * S * S
    bytes_accessed = (B * S * E * (w_bytes + x.dtype.itemsize)
                      + B * num_q_tiles * 4 * E * E * w_bytes)

    # qi carries the K/V cache when tiled, so it must be "arbitrary" then.
    dim_sem = ("parallel", "arbitrary" if tiled_q else "parallel", "arbitrary")

    return pl.pallas_call(
        kernel,
        out_shape=jax.ShapeDtypeStruct((B, S, E), x.dtype),
        grid=(B, num_q_tiles, n_hsteps),
        in_specs=in_specs,
        out_specs=pl.BlockSpec((1, TQ, E), lambda b, qi, h: (b, qi, 0)),
        scratch_shapes=scratch_shapes,
        compiler_params=pltpu.CompilerParams(
            dimension_semantics=dim_sem,
            vmem_limit_bytes=vmem_limit_bytes),
        cost_estimate=pl.CostEstimate(
            flops=flops, transcendentals=transcendentals,
            bytes_accessed=bytes_accessed),
    )(*args)


def _reference(x, params, num_heads):
    """Pure-JAX reference mirroring the PyTorch forward (mask=None)."""
    B, S, E = x.shape
    D = E // num_heads

    def lin(z, w, b):
        return z @ w + b

    q = lin(x, params["wq"], params["bq"]).reshape(B, S, num_heads, D).transpose(0, 2, 1, 3)
    k = lin(x, params["wk"], params["bk"]).reshape(B, S, num_heads, D).transpose(0, 2, 1, 3)
    v = lin(x, params["wv"], params["bv"]).reshape(B, S, num_heads, D).transpose(0, 2, 1, 3)

    scores = jnp.einsum("bhqd,bhkd->bhqk", q, k) / math.sqrt(D)
    attn = jax.nn.softmax(scores, axis=-1)
    out = jnp.einsum("bhqk,bhkd->bhqd", attn, v)
    out = out.transpose(0, 2, 1, 3).reshape(B, S, E)
    return lin(out, params["wo"], params["bo"])


if __name__ == "__main__":
    B, E, H = 2, 32, 4  # batch, embedding_dim, num_heads

    key = jax.random.PRNGKey(0)
    keys = jax.random.split(key, 10)
    w_scale = 1.0 / math.sqrt(E)

    params = {
        "wq": jax.random.normal(keys[0], (E, E), jnp.float32) * w_scale,
        "bq": jax.random.normal(keys[1], (1, E), jnp.float32) * 0.1,
        "wk": jax.random.normal(keys[2], (E, E), jnp.float32) * w_scale,
        "bk": jax.random.normal(keys[3], (1, E), jnp.float32) * 0.1,
        "wv": jax.random.normal(keys[4], (E, E), jnp.float32) * w_scale,
        "bv": jax.random.normal(keys[5], (1, E), jnp.float32) * 0.1,
        "wo": jax.random.normal(keys[6], (E, E), jnp.float32) * w_scale,
        "bo": jax.random.normal(keys[7], (1, E), jnp.float32) * 0.1,
    }

    # --- Config 1: default fast path (bf16 MXU operands, single query tile).
    S = 8
    x = jax.random.normal(keys[8], (B, S, E), jnp.float32)
    out = jax.block_until_ready(multi_head_self_attention(x, params, H))
    ref = _reference(x, params, H)
    assert out.shape == (B, S, E)
    # Loose tolerance: bf16 operands + approx (EUP) reciprocal on the fast path.
    assert jnp.allclose(out, ref, atol=1e-1, rtol=1e-1), "bf16 path mismatch vs. reference"

    # --- Config 2: f32 MXU operands + exact reciprocal (tight reference check).
    out32 = jax.block_until_ready(
        multi_head_self_attention(x, params, H,
                                  compute_dtype=jnp.float32, approx_recip=False))
    assert jnp.allclose(out32, ref, atol=1e-4, rtol=1e-4), "f32 path mismatch vs. reference"

    # --- Config 3: query-tiled path (exercises separate q tiles + K/V VMEM cache).
    S2 = 16
    x2 = jax.random.normal(keys[9], (B, S2, E), jnp.float32)
    out_t = jax.block_until_ready(
        multi_head_self_attention(x2, params, H, max_q_tile=8,
                                  compute_dtype=jnp.float32, approx_recip=False))
    ref2 = _reference(x2, params, H)
    assert jnp.allclose(out_t, ref2, atol=1e-4, rtol=1e-4), "tiled/KV-cache path mismatch"

    print("KERNEL_OK")
</pallas_src>

<mosaic_0001>
module attributes {stable_mosaic.version = 11 : i64} {
  func.func @_mhsa_kernel(%arg0: i32, %arg1: i32, %arg2: i32, %arg3: memref<1x8x32xbf16, #tpu.memory_space<vmem>>, %arg4: memref<1x32x32xbf16, #tpu.memory_space<vmem>>, %arg5: memref<1x32x32xbf16, #tpu.memory_space<vmem>>, %arg6: memref<1x32x32xbf16, #tpu.memory_space<vmem>>, %arg7: memref<1x32x32xbf16, #tpu.memory_space<vmem>>, %arg8: memref<1x1x32xf32, #tpu.memory_space<vmem>>, %arg9: memref<1x1x32xf32, #tpu.memory_space<vmem>>, %arg10: memref<1x1x32xf32, #tpu.memory_space<vmem>>, %arg11: memref<1x32xf32, #tpu.memory_space<vmem>>, %arg12: memref<1x8x32xf32, #tpu.memory_space<vmem>>, %arg13: memref<8x32xf32, #tpu.memory_space<vmem>>) attributes {dimension_semantics = [#tpu.dimension_semantics<parallel>, #tpu.dimension_semantics<parallel>, #tpu.dimension_semantics<arbitrary>], iteration_bounds = array<i64: 2, 1, 1>, scalar_prefetch = 0 : i64, scratch_operands = 1 : i64, tpu.core_type = #tpu.core_type<tc>, window_params = [{transform_indices = @transform_0, window_bounds = array<i64: 1, 8, 32>}, {transform_indices = @transform_1, window_bounds = array<i64: 1, 32, 32>}, {transform_indices = @transform_2, window_bounds = array<i64: 1, 32, 32>}, {transform_indices = @transform_3, window_bounds = array<i64: 1, 32, 32>}, {transform_indices = @transform_4, window_bounds = array<i64: 1, 32, 32>}, {transform_indices = @transform_5, window_bounds = array<i64: 1, 1, 32>}, {transform_indices = @transform_6, window_bounds = array<i64: 1, 1, 32>}, {transform_indices = @transform_7, window_bounds = array<i64: 1, 1, 32>}, {pipeline_mode = #tpu.pipeline_mode<synchronous>, transform_indices = @transform_8, window_bounds = array<i64: 1, 32>}, {transform_indices = @transform_9, window_bounds = array<i64: 1, 8, 32>}]} {
    %c0_i32 = arith.constant 0 : i32
    %0 = arith.cmpi eq, %arg2, %c0_i32 : i32
    %1 = arith.extui %0 : i1 to i32
    %c0_i32_0 = arith.constant 0 : i32
    %2 = arith.cmpi ne, %1, %c0_i32_0 : i32
    scf.if %2 {
      %cst_67 = arith.constant 0.000000e+00 : f32
      %124 = vector.broadcast %cst_67 : f32 to vector<8x32xf32>
      %c0_68 = arith.constant 0 : index
      %c0_69 = arith.constant 0 : index
      %125 = vector.load %arg13[%c0_68, %c0_69] : memref<8x32xf32, #tpu.memory_space<vmem>>, vector<8x32xf32>
      tpu.vector_store %arg13[%c0_68, %c0_69], %124 {strides = array<i32>} : memref<8x32xf32, #tpu.memory_space<vmem>>, vector<8x32xf32>,
    } else {
    }
    %c0 = arith.constant 0 : index
    %c0_1 = arith.constant 0 : index
    %c0_2 = arith.constant 0 : index
    %3 = vector.load %arg4[%c0, %c0_1, %c0_2] : memref<1x32x32xbf16, #tpu.memory_space<vmem>>, vector<1x32x32xbf16>
    %4 = vector.shape_cast %3 : vector<1x32x32xbf16> to vector<32x32xbf16>
    %c0_3 = arith.constant 0 : index
    %c0_4 = arith.constant 0 : index
    %c0_5 = arith.constant 0 : index
    %5 = vector.load %arg5[%c0_3, %c0_4, %c0_5] : memref<1x32x32xbf16, #tpu.memory_space<vmem>>, vector<1x32x32xbf16>
    %6 = vector.shape_cast %5 : vector<1x32x32xbf16> to vector<32x32xbf16>
    %c0_6 = arith.constant 0 : index
    %c0_7 = arith.constant 0 : index
    %c0_8 = arith.constant 0 : index
    %7 = vector.load %arg6[%c0_6, %c0_7, %c0_8] : memref<1x32x32xbf16, #tpu.memory_space<vmem>>, vector<1x32x32xbf16>
    %8 = vector.shape_cast %7 : vector<1x32x32xbf16> to vector<32x32xbf16>
    %c0_9 = arith.constant 0 : index
    %c0_10 = arith.constant 0 : index
    %c0_11 = arith.constant 0 : index
    %9 = vector.load %arg7[%c0_9, %c0_10, %c0_11] : memref<1x32x32xbf16, #tpu.memory_space<vmem>>, vector<1x32x32xbf16>
    %10 = vector.shape_cast %9 : vector<1x32x32xbf16> to vector<32x32xbf16>
    %c0_12 = arith.constant 0 : index
    %c0_13 = arith.constant 0 : index
    %c0_14 = arith.constant 0 : index
    %11 = vector.load %arg3[%c0_12, %c0_13, %c0_14] : memref<1x8x32xbf16, #tpu.memory_space<vmem>>, vector<1x8x32xbf16>
    %12 = vector.shape_cast %11 : vector<1x8x32xbf16> to vector<8x32xbf16>
    %cst = arith.constant dense<0.000000e+00> : vector<8x32xf32>
    %13 = tpu.matmul %12, %4, %cst {dimension_numbers = #tpu.dot_dimension_numbers<[1], [0], [0], [1], [0, 0, 1, 1], [], []>} : vector<8x32xbf16>, vector<32x32xbf16>, vector<8x32xf32> -> vector<8x32xf32>
    %c0_15 = arith.constant 0 : index
    %c0_16 = arith.constant 0 : index
    %c0_17 = arith.constant 0 : index
    %14 = vector.load %arg8[%c0_15, %c0_16, %c0_17] : memref<1x1x32xf32, #tpu.memory_space<vmem>>, vector<1x1x32xf32>
    %15 = vector.shape_cast %14 : vector<1x1x32xf32> to vector<1x32xf32>
    %16 = vector.broadcast %15 : vector<1x32xf32> to vector<8x32xf32>
    %17 = arith.addf %13, %16 : vector<8x32xf32>
    %18 = arith.truncf %17 : vector<8x32xf32> to vector<8x32xbf16>
    %c0_18 = arith.constant 0 : index
    %c0_19 = arith.constant 0 : index
    %c0_20 = arith.constant 0 : index
    %19 = vector.load %arg3[%c0_18, %c0_19, %c0_20] : memref<1x8x32xbf16, #tpu.memory_space<vmem>>, vector<1x8x32xbf16>
    %20 = vector.shape_cast %19 : vector<1x8x32xbf16> to vector<8x32xbf16>
    %cst_21 = arith.constant dense<0.000000e+00> : vector<8x32xf32>
    %21 = tpu.matmul %20, %6, %cst_21 {dimension_numbers = #tpu.dot_dimension_numbers<[1], [0], [0], [1], [0, 0, 1, 1], [], []>} : vector<8x32xbf16>, vector<32x32xbf16>, vector<8x32xf32> -> vector<8x32xf32>
    %c0_22 = arith.constant 0 : index
    %c0_23 = arith.constant 0 : index
    %c0_24 = arith.constant 0 : index
    %22 = vector.load %arg9[%c0_22, %c0_23, %c0_24] : memref<1x1x32xf32, #tpu.memory_space<vmem>>, vector<1x1x32xf32>
    %23 = vector.shape_cast %22 : vector<1x1x32xf32> to vector<1x32xf32>
    %24 = vector.broadcast %23 : vector<1x32xf32> to vector<8x32xf32>
    %25 = arith.addf %21, %24 : vector<8x32xf32>
    %26 = arith.truncf %25 : vector<8x32xf32> to vector<8x32xbf16>
    %cst_25 = arith.constant dense<0.000000e+00> : vector<8x32xf32>
    %27 = tpu.matmul %20, %8, %cst_25 {dimension_numbers = #tpu.dot_dimension_numbers<[1], [0], [0], [1], [0, 0, 1, 1], [], []>} : vector<8x32xbf16>, vector<32x32xbf16>, vector<8x32xf32> -> vector<8x32xf32>
    %c0_26 = arith.constant 0 : index
    %c0_27 = arith.constant 0 : index
    %c0_28 = arith.constant 0 : index
    %28 = vector.load %arg10[%c0_26, %c0_27, %c0_28] : memref<1x1x32xf32, #tpu.memory_space<vmem>>, vector<1x1x32xf32>
    %29 = vector.shape_cast %28 : vector<1x1x32xf32> to vector<1x32xf32>
    %30 = vector.broadcast %29 : vector<1x32xf32> to vector<8x32xf32>
    %31 = arith.addf %27, %30 : vector<8x32xf32>
    %32 = arith.truncf %31 : vector<8x32xf32> to vector<8x32xbf16>
    %33 = vector.extract_strided_slice %18 {offsets = [0, 0], sizes = [8, 8], strides = [1, 1]} : vector<8x32xbf16> to vector<8x8xbf16>
    %34 = vector.extract_strided_slice %26 {offsets = [0, 0], sizes = [8, 8], strides = [1, 1]} : vector<8x32xbf16> to vector<8x8xbf16>
    %35 = vector.extract_strided_slice %32 {offsets = [0, 0], sizes = [8, 8], strides = [1, 1]} : vector<8x32xbf16> to vector<8x8xbf16>
    %cst_29 = arith.constant dense<0.000000e+00> : vector<8x8xf32>
    %36 = tpu.matmul %33, %34, %cst_29 {dimension_numbers = #tpu.dot_dimension_numbers<[1], [1], [0], [0], [0, 0, 1, 0], [], []>} : vector<8x8xbf16>, vector<8x8xbf16>, vector<8x8xf32> -> vector<8x8xf32>
    %cst_30 = arith.constant dense<0xFF800000> : vector<8xf32>
    %37 = vector.multi_reduction <maximumf>, %36, %cst_30 [1] : vector<8x8xf32> to vector<8xf32>
    %38 = vector.shape_cast %37 : vector<8xf32> to vector<8x1xf32>
    %39 = vector.broadcast %38 : vector<8x1xf32> to vector<8x8xf32>
    %40 = arith.subf %36, %39 : vector<8x8xf32>
    %41 = math.exp %40 : vector<8x8xf32>
    %cst_31 = arith.constant dense<0.000000e+00> : vector<8xf32>
    %42 = vector.multi_reduction <add>, %41, %cst_31 [1] : vector<8x8xf32> to vector<8xf32>
    %43 = vector.shape_cast %42 : vector<8xf32> to vector<8x1xf32>
    %44 = arith.truncf %41 : vector<8x8xf32> to vector<8x8xbf16>
    %cst_32 = arith.constant dense<0.000000e+00> : vector<8x8xf32>
    %45 = tpu.matmul %44, %35, %cst_32 {dimension_numbers = #tpu.dot_dimension_numbers<[1], [0], [0], [1], [0, 0, 1, 1], [], []>} : vector<8x8xbf16>, vector<8x8xbf16>, vector<8x8xf32> -> vector<8x8xf32>
    %46 = tpu.reciprocal %43 {approx = true} : vector<8x1xf32> -> vector<8x1xf32>
    %47 = vector.broadcast %46 : vector<8x1xf32> to vector<8x8xf32>
    %48 = arith.mulf %45, %47 : vector<8x8xf32>
    %c0_33 = arith.constant 0 : index
    %c0_34 = arith.constant 0 : index
    %49 = vector.load %arg13[%c0_33, %c0_34] : memref<8x32xf32, #tpu.memory_space<vmem>>, vector<8x32xf32>
    %50 = arith.truncf %48 : vector<8x8xf32> to vector<8x8xbf16>
    %51 = vector.extract_strided_slice %10 {offsets = [0, 0], sizes = [8, 32], strides = [1, 1]} : vector<32x32xbf16> to vector<8x32xbf16>
    %cst_35 = arith.constant dense<0.000000e+00> : vector<8x32xf32>
    %52 = tpu.matmul %50, %51, %cst_35 {dimension_numbers = #tpu.dot_dimension_numbers<[1], [0], [0], [1], [0, 0, 1, 1], [], []>} : vector<8x8xbf16>, vector<8x32xbf16>, vector<8x32xf32> -> vector<8x32xf32>
    %53 = arith.addf %49, %52 : vector<8x32xf32>
    %c0_36 = arith.constant 0 : index
    %c0_37 = arith.constant 0 : index
    %54 = vector.load %arg13[%c0_36, %c0_37] : memref<8x32xf32, #tpu.memory_space<vmem>>, vector<8x32xf32>
    tpu.vector_store %arg13[%c0_36, %c0_37], %53 {strides = array<i32>} : memref<8x32xf32, #tpu.memory_space<vmem>>, vector<8x32xf32>,
    %55 = vector.extract_strided_slice %18 {offsets = [0, 8], sizes = [8, 8], strides = [1, 1]} : vector<8x32xbf16> to vector<8x8xbf16>
    %56 = vector.extract_strided_slice %26 {offsets = [0, 8], sizes = [8, 8], strides = [1, 1]} : vector<8x32xbf16> to vector<8x8xbf16>
    %57 = vector.extract_strided_slice %32 {offsets = [0, 8], sizes = [8, 8], strides = [1, 1]} : vector<8x32xbf16> to vector<8x8xbf16>
    %cst_38 = arith.constant dense<0.000000e+00> : vector<8x8xf32>
    %58 = tpu.matmul %55, %56, %cst_38 {dimension_numbers = #tpu.dot_dimension_numbers<[1], [1], [0], [0], [0, 0, 1, 0], [], []>} : vector<8x8xbf16>, vector<8x8xbf16>, vector<8x8xf32> -> vector<8x8xf32>
    %cst_39 = arith.constant dense<0xFF800000> : vector<8xf32>
    %59 = vector.multi_reduction <maximumf>, %58, %cst_39 [1] : vector<8x8xf32> to vector<8xf32>
    %60 = vector.shape_cast %59 : vector<8xf32> to vector<8x1xf32>
    %61 = vector.broadcast %60 : vector<8x1xf32> to vector<8x8xf32>
    %62 = arith.subf %58, %61 : vector<8x8xf32>
    %63 = math.exp %62 : vector<8x8xf32>
    %cst_40 = arith.constant dense<0.000000e+00> : vector<8xf32>
    %64 = vector.multi_reduction <add>, %63, %cst_40 [1] : vector<8x8xf32> to vector<8xf32>
    %65 = vector.shape_cast %64 : vector<8xf32> to vector<8x1xf32>
    %66 = arith.truncf %63 : vector<8x8xf32> to vector<8x8xbf16>
    %cst_41 = arith.constant dense<0.000000e+00> : vector<8x8xf32>
    %67 = tpu.matmul %66, %57, %cst_41 {dimension_numbers = #tpu.dot_dimension_numbers<[1], [0], [0], [1], [0, 0, 1, 1], [], []>} : vector<8x8xbf16>, vector<8x8xbf16>, vector<8x8xf32> -> vector<8x8xf32>
    %68 = tpu.reciprocal %65 {approx = true} : vector<8x1xf32> -> vector<8x1xf32>
    %69 = vector.broadcast %68 : vector<8x1xf32> to vector<8x8xf32>
    %70 = arith.mulf %67, %69 : vector<8x8xf32>
    %c0_42 = arith.constant 0 : index
    %c0_43 = arith.constant 0 : index
    %71 = vector.load %arg13[%c0_42, %c0_43] : memref<8x32xf32, #tpu.memory_space<vmem>>, vector<8x32xf32>
    %72 = arith.truncf %70 : vector<8x8xf32> to vector<8x8xbf16>
    %73 = vector.extract_strided_slice %10 {offsets = [8, 0], sizes = [8, 32], strides = [1, 1]} : vector<32x32xbf16> to vector<8x32xbf16>
    %cst_44 = arith.constant dense<0.000000e+00> : vector<8x32xf32>
    %74 = tpu.matmul %72, %73, %cst_44 {dimension_numbers = #tpu.dot_dimension_numbers<[1], [0], [0], [1], [0, 0, 1, 1], [], []>} : vector<8x8xbf16>, vector<8x32xbf16>, vector<8x32xf32> -> vector<8x32xf32>
    %75 = arith.addf %71, %74 : vector<8x32xf32>
    %c0_45 = arith.constant 0 : index
    %c0_46 = arith.constant 0 : index
    %76 = vector.load %arg13[%c0_45, %c0_46] : memref<8x32xf32, #tpu.memory_space<vmem>>, vector<8x32xf32>
    tpu.vector_store %arg13[%c0_45, %c0_46], %75 {strides = array<i32>} : memref<8x32xf32, #tpu.memory_space<vmem>>, vector<8x32xf32>,
    %77 = vector.extract_strided_slice %18 {offsets = [0, 16], sizes = [8, 8], strides = [1, 1]} : vector<8x32xbf16> to vector<8x8xbf16>
    %78 = vector.extract_strided_slice %26 {offsets = [0, 16], sizes = [8, 8], strides = [1, 1]} : vector<8x32xbf16> to vector<8x8xbf16>
    %79 = vector.extract_strided_slice %32 {offsets = [0, 16], sizes = [8, 8], strides = [1, 1]} : vector<8x32xbf16> to vector<8x8xbf16>
    %cst_47 = arith.constant dense<0.000000e+00> : vector<8x8xf32>
    %80 = tpu.matmul %77, %78, %cst_47 {dimension_numbers = #tpu.dot_dimension_numbers<[1], [1], [0], [0], [0, 0, 1, 0], [], []>} : vector<8x8xbf16>, vector<8x8xbf16>, vector<8x8xf32> -> vector<8x8xf32>
    %cst_48 = arith.constant dense<0xFF800000> : vector<8xf32>
    %81 = vector.multi_reduction <maximumf>, %80, %cst_48 [1] : vector<8x8xf32> to vector<8xf32>
    %82 = vector.shape_cast %81 : vector<8xf32> to vector<8x1xf32>
    %83 = vector.broadcast %82 : vector<8x1xf32> to vector<8x8xf32>
    %84 = arith.subf %80, %83 : vector<8x8xf32>
    %85 = math.exp %84 : vector<8x8xf32>
    %cst_49 = arith.constant dense<0.000000e+00> : vector<8xf32>
    %86 = vector.multi_reduction <add>, %85, %cst_49 [1] : vector<8x8xf32> to vector<8xf32>
    %87 = vector.shape_cast %86 : vector<8xf32> to vector<8x1xf32>
    %88 = arith.truncf %85 : vector<8x8xf32> to vector<8x8xbf16>
    %cst_50 = arith.constant dense<0.000000e+00> : vector<8x8xf32>
    %89 = tpu.matmul %88, %79, %cst_50 {dimension_numbers = #tpu.dot_dimension_numbers<[1], [0], [0], [1], [0, 0, 1, 1], [], []>} : vector<8x8xbf16>, vector<8x8xbf16>, vector<8x8xf32> -> vector<8x8xf32>
    %90 = tpu.reciprocal %87 {approx = true} : vector<8x1xf32> -> vector<8x1xf32>
    %91 = vector.broadcast %90 : vector<8x1xf32> to vector<8x8xf32>
    %92 = arith.mulf %89, %91 : vector<8x8xf32>
    %c0_51 = arith.constant 0 : index
    %c0_52 = arith.constant 0 : index
    %93 = vector.load %arg13[%c0_51, %c0_52] : memref<8x32xf32, #tpu.memory_space<vmem>>, vector<8x32xf32>
    %94 = arith.truncf %92 : vector<8x8xf32> to vector<8x8xbf16>
    %95 = vector.extract_strided_slice %10 {offsets = [16, 0], sizes = [8, 32], strides = [1, 1]} : vector<32x32xbf16> to vector<8x32xbf16>
    %cst_53 = arith.constant dense<0.000000e+00> : vector<8x32xf32>
    %96 = tpu.matmul %94, %95, %cst_53 {dimension_numbers = #tpu.dot_dimension_numbers<[1], [0], [0], [1], [0, 0, 1, 1], [], []>} : vector<8x8xbf16>, vector<8x32xbf16>, vector<8x32xf32> -> vector<8x32xf32>
    %97 = arith.addf %93, %96 : vector<8x32xf32>
    %c0_54 = arith.constant 0 : index
    %c0_55 = arith.constant 0 : index
    %98 = vector.load %arg13[%c0_54, %c0_55] : memref<8x32xf32, #tpu.memory_space<vmem>>, vector<8x32xf32>
    tpu.vector_store %arg13[%c0_54, %c0_55], %97 {strides = array<i32>} : memref<8x32xf32, #tpu.memory_space<vmem>>, vector<8x32xf32>,
    %99 = vector.extract_strided_slice %18 {offsets = [0, 24], sizes = [8, 8], strides = [1, 1]} : vector<8x32xbf16> to vector<8x8xbf16>
    %100 = vector.extract_strided_slice %26 {offsets = [0, 24], sizes = [8, 8], strides = [1, 1]} : vector<8x32xbf16> to vector<8x8xbf16>
    %101 = vector.extract_strided_slice %32 {offsets = [0, 24], sizes = [8, 8], strides = [1, 1]} : vector<8x32xbf16> to vector<8x8xbf16>
    %cst_56 = arith.constant dense<0.000000e+00> : vector<8x8xf32>
    %102 = tpu.matmul %99, %100, %cst_56 {dimension_numbers = #tpu.dot_dimension_numbers<[1], [1], [0], [0], [0, 0, 1, 0], [], []>} : vector<8x8xbf16>, vector<8x8xbf16>, vector<8x8xf32> -> vector<8x8xf32>
    %cst_57 = arith.constant dense<0xFF800000> : vector<8xf32>
    %103 = vector.multi_reduction <maximumf>, %102, %cst_57 [1] : vector<8x8xf32> to vector<8xf32>
    %104 = vector.shape_cast %103 : vector<8xf32> to vector<8x1xf32>
    %105 = vector.broadcast %104 : vector<8x1xf32> to vector<8x8xf32>
    %106 = arith.subf %102, %105 : vector<8x8xf32>
    %107 = math.exp %106 : vector<8x8xf32>
    %cst_58 = arith.constant dense<0.000000e+00> : vector<8xf32>
    %108 = vector.multi_reduction <add>, %107, %cst_58 [1] : vector<8x8xf32> to vector<8xf32>
    %109 = vector.shape_cast %108 : vector<8xf32> to vector<8x1xf32>
    %110 = arith.truncf %107 : vector<8x8xf32> to vector<8x8xbf16>
    %cst_59 = arith.constant dense<0.000000e+00> : vector<8x8xf32>
    %111 = tpu.matmul %110, %101, %cst_59 {dimension_numbers = #tpu.dot_dimension_numbers<[1], [0], [0], [1], [0, 0, 1, 1], [], []>} : vector<8x8xbf16>, vector<8x8xbf16>, vector<8x8xf32> -> vector<8x8xf32>
    %112 = tpu.reciprocal %109 {approx = true} : vector<8x1xf32> -> vector<8x1xf32>
    %113 = vector.broadcast %112 : vector<8x1xf32> to vector<8x8xf32>
    %114 = arith.mulf %111, %113 : vector<8x8xf32>
    %c0_60 = arith.constant 0 : index
    %c0_61 = arith.constant 0 : index
    %115 = vector.load %arg13[%c0_60, %c0_61] : memref<8x32xf32, #tpu.memory_space<vmem>>, vector<8x32xf32>
    %116 = arith.truncf %114 : vector<8x8xf32> to vector<8x8xbf16>
    %117 = vector.extract_strided_slice %10 {offsets = [24, 0], sizes = [8, 32], strides = [1, 1]} : vector<32x32xbf16> to vector<8x32xbf16>
    %cst_62 = arith.constant dense<0.000000e+00> : vector<8x32xf32>
    %118 = tpu.matmul %116, %117, %cst_62 {dimension_numbers = #tpu.dot_dimension_numbers<[1], [0], [0], [1], [0, 0, 1, 1], [], []>} : vector<8x8xbf16>, vector<8x32xbf16>, vector<8x32xf32> -> vector<8x32xf32>
    %119 = arith.addf %115, %118 : vector<8x32xf32>
    %c0_63 = arith.constant 0 : index
    %c0_64 = arith.constant 0 : index
    %120 = vector.load %arg13[%c0_63, %c0_64] : memref<8x32xf32, #tpu.memory_space<vmem>>, vector<8x32xf32>
    tpu.vector_store %arg13[%c0_63, %c0_64], %119 {strides = array<i32>} : memref<8x32xf32, #tpu.memory_space<vmem>>, vector<8x32xf32>,
    %c0_i32_65 = arith.constant 0 : i32
    %121 = arith.cmpi eq, %arg2, %c0_i32_65 : i32
    %122 = arith.extui %121 : i1 to i32
    %c0_i32_66 = arith.constant 0 : i32
    %123 = arith.cmpi ne, %122, %c0_i32_66 : i32
    scf.if %123 {
      %c0_67 = arith.constant 0 : index
      %c0_68 = arith.constant 0 : index
      %124 = vector.load %arg13[%c0_67, %c0_68] : memref<8x32xf32, #tpu.memory_space<vmem>>, vector<8x32xf32>
      %c0_69 = arith.constant 0 : index
      %c0_70 = arith.constant 0 : index
      %125 = vector.load %arg11[%c0_69, %c0_70] : memref<1x32xf32, #tpu.memory_space<vmem>>, vector<1x32xf32>
      %126 = vector.broadcast %125 : vector<1x32xf32> to vector<8x32xf32>
      %127 = arith.addf %124, %126 : vector<8x32xf32>
      %c0_71 = arith.constant 0 : index
      %c0_72 = arith.constant 0 : index
      %c0_73 = arith.constant 0 : index
      %128 = vector.load %arg12[%c0_71, %c0_72, %c0_73] : memref<1x8x32xf32, #tpu.memory_space<vmem>>, vector<1x8x32xf32>
      %129 = vector.shape_cast %128 : vector<1x8x32xf32> to vector<8x32xf32>
      %130 = vector.shape_cast %127 : vector<8x32xf32> to vector<1x8x32xf32>
      tpu.vector_store %arg12[%c0_71, %c0_72, %c0_73], %130 {strides = array<i32>} : memref<1x8x32xf32, #tpu.memory_space<vmem>>, vector<1x8x32xf32>,
    } else {
    }
    return
  }
  func.func @transform_0(%arg0: i32, %arg1: i32, %arg2: i32) -> (i32, i32, i32) {
    %c0_i32 = arith.constant 0 : i32
    %c0_i32_0 = arith.constant 0 : i32
    %c0_i32_1 = arith.constant 0 : i32
    return %arg0, %c0_i32, %c0_i32_0 : i32, i32, i32
  }
  func.func @transform_1(%arg0: i32, %arg1: i32, %arg2: i32) -> (i32, i32, i32) {
    %c0_i32 = arith.constant 0 : i32
    %c0_i32_0 = arith.constant 0 : i32
    %c0_i32_1 = arith.constant 0 : i32
    return %arg2, %c0_i32, %c0_i32_0 : i32, i32, i32
  }
  func.func @transform_2(%arg0: i32, %arg1: i32, %arg2: i32) -> (i32, i32, i32) {
    %c0_i32 = arith.constant 0 : i32
    %c0_i32_0 = arith.constant 0 : i32
    %c0_i32_1 = arith.constant 0 : i32
    return %arg2, %c0_i32, %c0_i32_0 : i32, i32, i32
  }
  func.func @transform_3(%arg0: i32, %arg1: i32, %arg2: i32) -> (i32, i32, i32) {
    %c0_i32 = arith.constant 0 : i32
    %c0_i32_0 = arith.constant 0 : i32
    %c0_i32_1 = arith.constant 0 : i32
    return %arg2, %c0_i32, %c0_i32_0 : i32, i32, i32
  }
  func.func @transform_4(%arg0: i32, %arg1: i32, %arg2: i32) -> (i32, i32, i32) {
    %c0_i32 = arith.constant 0 : i32
    %c0_i32_0 = arith.constant 0 : i32
    %c0_i32_1 = arith.constant 0 : i32
    return %arg2, %c0_i32, %c0_i32_0 : i32, i32, i32
  }
  func.func @transform_5(%arg0: i32, %arg1: i32, %arg2: i32) -> (i32, i32, i32) {
    %c0_i32 = arith.constant 0 : i32
    %c0_i32_0 = arith.constant 0 : i32
    %c0_i32_1 = arith.constant 0 : i32
    return %arg2, %c0_i32, %c0_i32_0 : i32, i32, i32
  }
  func.func @transform_6(%arg0: i32, %arg1: i32, %arg2: i32) -> (i32, i32, i32) {
    %c0_i32 = arith.constant 0 : i32
    %c0_i32_0 = arith.constant 0 : i32
    %c0_i32_1 = arith.constant 0 : i32
    return %arg2, %c0_i32, %c0_i32_0 : i32, i32, i32
  }
  func.func @transform_7(%arg0: i32, %arg1: i32, %arg2: i32) -> (i32, i32, i32) {
    %c0_i32 = arith.constant 0 : i32
    %c0_i32_0 = arith.constant 0 : i32
    %c0_i32_1 = arith.constant 0 : i32
    return %arg2, %c0_i32, %c0_i32_0 : i32, i32, i32
  }
  func.func @transform_8(%arg0: i32, %arg1: i32, %arg2: i32) -> (i32, i32) {
    %c0_i32 = arith.constant 0 : i32
    %c0_i32_0 = arith.constant 0 : i32
    %c0_i32_1 = arith.constant 0 : i32
    return %c0_i32, %c0_i32_0 : i32, i32
  }
  func.func @transform_9(%arg0: i32, %arg1: i32, %arg2: i32) -> (i32, i32, i32) {
    %c0_i32 = arith.constant 0 : i32
    %c0_i32_0 = arith.constant 0 : i32
    return %arg0, %arg1, %c0_i32 : i32, i32, i32
  }
}

</mosaic_0001>

<llo_original>
// kernel: tpu_custom_call.1
$region0: #{tpu_custom_call.1}
  #allocation0 [shape = 'u32[]', space=smem, size = 0x4, offset = 0x4, fixed_abs, tag = 'smem constant byte address 0x4 - core index']
  #allocation1 [shape = 'u32[144,128]{1,0:T(1,128)}', space=vmem, size = 0x12000, scoped, tag = 'internal scratch']
  #allocation2 [shape = 'f32[8,32]{1,0:T(8,128)}', space=vmem, size = 0x1000, scoped, tag = 'scratch operand']
  %s0 = inlined_call_operand.hbm [shape: bf16[2,8,32], index: 0, kind: input, shape index: {}]
  %s1 = inlined_call_operand.hbm [shape: bf16[1,32,32], index: 1, kind: input, shape index: {}]
  %s2 = inlined_call_operand.hbm [shape: bf16[1,32,32], index: 2, kind: input, shape index: {}]
  %s3 = inlined_call_operand.hbm [shape: bf16[1,32,32], index: 3, kind: input, shape index: {}]
  %s4 = inlined_call_operand.hbm [shape: bf16[1,32,32], index: 4, kind: input, shape index: {}]
  %s5 = inlined_call_operand.vmem [shape: f32[1,1,32], index: 5, kind: input, shape index: {}]
  %s6 = inlined_call_operand.vmem [shape: f32[1,1,32], index: 6, kind: input, shape index: {}]
  %s7 = inlined_call_operand.vmem [shape: f32[1,1,32], index: 7, kind: input, shape index: {}]
  %s8 = inlined_call_operand.vmem [shape: f32[1,32], index: 8, kind: input, shape index: {}]
  %s9 = inlined_call_operand.hbm [shape: f32[2,8,32], index: 9, kind: output, shape index: {}]
  %s10 = sld [smem:[#allocation0]]
  $region97: #{tpu_custom_call.1} parent=0
    _
  %s12 = ssub.s32 1, %s10
  %s13 = scalar_select 0, %s12, %s10
  $region1: #{tpu_custom_call.1} parent=0
    #allocation3 [shape = 'u8[4096]{0}', space=vmem, size = 0x1000, scoped, tag = 'input window, operand 0']
    #allocation4 [shape = 's32[2]{0}', space=sflag, size = 0x8, scoped, tag = 'scoped memory for tpu_custom_call.1']
    #allocation5 [shape = 's32[2]{0}', space=sflag, size = 0x8, scoped, tag = 'scoped memory for tpu_custom_call.1']
    #allocation6 [shape = 'u8[8192]{0}', space=vmem, size = 0x2000, scoped, tag = 'input window, operand 1, single buffered']
    #allocation7 [shape = 's32[1]{0}', space=sflag, size = 0x4, scoped, tag = 'scoped memory for tpu_custom_call.1']
    #allocation8 [shape = 'u8[8192]{0}', space=vmem, size = 0x2000, scoped, tag = 'input window, operand 2, single buffered']
    #allocation9 [shape = 'u8[8192]{0}', space=vmem, size = 0x2000, scoped, tag = 'input window, operand 3, single buffered']
    #allocation10 [shape = 's32[1]{0}', space=sflag, size = 0x4, scoped, tag = 'scoped memory for tpu_custom_call.1']
    #allocation11 [shape = 'u8[8192]{0}', space=vmem, size = 0x2000, scoped, tag = 'input window, operand 4, single buffered']
    #allocation12 [shape = 'u8[8192]{0}', space=vmem, size = 0x2000, scoped, tag = 'output window, operand 0']
    %14 = vsyncpa [#allocation4], 0
    %s15 = scalar_lea.sflag [#allocation4], 1
    %16 = vsyncpa %s15, 0
    %17 = vsyncpa [#allocation7], 0
    %18 = vsyncpa [#allocation10], 0
    %19 = vsyncpa [#allocation5], 0
    %s20 = scalar_lea.sflag [#allocation5], 1
    %21 = vsyncpa %s20, 0
    loop: start=0, step=1, limit=4
    $region2: #{tpu_custom_call.1} parent=1 // loop_pre_header
      _
    $region3: #{tpu_custom_call.1} parent=1 // loop_header
      %s23 = sphi 0, %s27
      %p24 = scmp.ge.s32.totalorder %s23, 4
      %s30 = sphi 0, %s49
      %s31 = sphi 0, %s45
      %s32 = sphi 0, %s41
      %s33 = sphi 0, %s30
      %s34 = sphi 0, %s31
      %s35 = sphi 0, %s32
      %s36 = sphi 0, %s33
      %s37 = sphi 0, %s34
      %s38 = sphi 0, %s35
      %s52 = sphi 0, %s54
      %s55 = sphi 0, %s52
      %s56 = sphi 0, %s55
      %s72 = sphi 0, %s56
      %s78 = sphi 0, %s80
      %s81 = sphi 0, %s78
      %s82 = sphi 0, %s81
      %s98 = sphi 0, %s82
      %s104 = sphi 0, %s106
      %s107 = sphi 0, %s104
      %s108 = sphi 0, %s107
      %s124 = sphi 0, %s108
      %s130 = sphi 0, %s132
      %s133 = sphi 0, %s130
      %s134 = sphi 0, %s133
      %s150 = sphi 0, %s134
      %s156 = sphi 0, %s158
      %s159 = sphi 0, %s156
      %s160 = sphi 0, %s159
      %s176 = sphi 0, %s160
      %s182 = sphi 0, %s184
      %s185 = sphi 0, %s182
      %s186 = sphi 0, %s185
      %s202 = sphi 0, %s186
      %s208 = sphi 0, %s210
      %s211 = sphi 0, %s208
      %s212 = sphi 0, %s211
      %s228 = sphi 0, %s212
      %s234 = sphi 0, %s236
      %s237 = sphi 0, %s234
      %s238 = sphi 0, %s237
      %s254 = sphi 0, %s238
      %s258 = sphi 0, %s258
      %s260 = sphi 0, %s258
      %s261 = sphi 0, %s260
      %s275 = sphi 0, %s261
      %s283 = sphi 0, %s285
      %s286 = sphi 0, %s283
      %s287 = sphi 0, %s286
      %s303 = sphi 0, %s287
    $region4: #{tpu_custom_call.1} parent=1 // loop_header_branch
      %26 = sbr.rel (%p24) target = $region8
    $region5: #{tpu_custom_call.1} parent=1 // loop_body
      %s28 = ssub.s32 %s23, 1
      %s29 = ssub.s32 %s23, 2
      %s39 = sadd.s32 1, %s32
      %p40 = scmp.ge.s32.totalorder %s39, 1
      %s41 = scalar_select %p40, 0, %s39
      %s42 = sadd.s32 1, %s31
      %s43 = scalar_select %p40, %s42, %s31
      %p44 = scmp.ge.s32.totalorder %s43, 1
      %s45 = scalar_select %p44, 0, %s43
      %s46 = sadd.s32 1, %s30
      %s47 = scalar_select %p44, %s46, %s30
      %p48 = scmp.ge.s32.totalorder %s47, 2
      %s49 = scalar_select %p48, 0, %s47
      %s50 = ssub.s32 %s30, %s49
      %p51 = scmp.eq.s32.totalorder %s50, 0
      %s53 = sadd.s32 %s52, 1
      %s54 = scalar_select %p51, %s52, %s53
      %p57 = pneg %p51
      %p58 = scmp.eq.s32.totalorder %s23, 1
      %p59 = por %p57, %p58
      %p60 = scmp.ne.s32.totalorder %s52, %s55
      %p61 = scmp.eq.s32.totalorder %s23, 0
      %p62 = por %p60, %p61
      %p63 = scmp.ne.s32.totalorder %s52, %s55
      %p64 = scmp.eq.s32.totalorder %s28, 1
      %p65 = por %p63, %p64
      %p66 = scmp.ne.s32.totalorder %s55, %s56
      %p67 = scmp.eq.s32.totalorder %s28, 0
      %p68 = por %p66, %p67
      %p69 = scmp.ne.s32.totalorder %s55, %s56
      %p70 = scmp.eq.s32.totalorder %s29, 1
      %p71 = por %p69, %p70
      %p73 = scmp.ne.s32.totalorder %s56, %s72
      %p74 = scmp.eq.s32.totalorder %s29, 0
      %p75 = por %p73, %p74
      %s76 = ssub.s32 %s32, %s41
      %p77 = scmp.eq.s32.totalorder %s76, 0
      %s79 = sadd.s32 %s78, 1
      %s80 = scalar_select %p77, %s78, %s79
      %p83 = pneg %p77
      %p84 = scmp.eq.s32.totalorder %s23, 1
      %p85 = por %p83, %p84
      %p86 = scmp.ne.s32.totalorder %s78, %s81
      %p87 = scmp.eq.s32.totalorder %s23, 0
      %p88 = por %p86, %p87
      %p89 = scmp.ne.s32.totalorder %s78, %s81
      %p90 = scmp.eq.s32.totalorder %s28, 1
      %p91 = por %p89, %p90
      %p92 = scmp.ne.s32.totalorder %s81, %s82
      %p93 = scmp.eq.s32.totalorder %s28, 0
      %p94 = por %p92, %p93
      %p95 = scmp.ne.s32.totalorder %s81, %s82
      %p96 = scmp.eq.s32.totalorder %s29, 1
      %p97 = por %p95, %p96
      %p99 = scmp.ne.s32.totalorder %s82, %s98
      %p100 = scmp.eq.s32.totalorder %s29, 0
      %p101 = por %p99, %p100
      %s102 = ssub.s32 %s32, %s41
      %p103 = scmp.eq.s32.totalorder %s102, 0
      %s105 = sadd.s32 %s104, 1
      %s106 = scalar_select %p103, %s104, %s105
      %p109 = pneg %p103
      %p110 = scmp.eq.s32.totalorder %s23, 1
      %p111 = por %p109, %p110
      %p112 = scmp.ne.s32.totalorder %s104, %s107
      %p113 = scmp.eq.s32.totalorder %s23, 0
      %p114 = por %p112, %p113
      %p115 = scmp.ne.s32.totalorder %s104, %s107
      %p116 = scmp.eq.s32.totalorder %s28, 1
      %p117 = por %p115, %p116
      %p118 = scmp.ne.s32.totalorder %s107, %s108
      %p119 = scmp.eq.s32.totalorder %s28, 0
      %p120 = por %p118, %p119
      %p121 = scmp.ne.s32.totalorder %s107, %s108
      %p122 = scmp.eq.s32.totalorder %s29, 1
      %p123 = por %p121, %p122
      %p125 = scmp.ne.s32.totalorder %s108, %s124
      %p126 = scmp.eq.s32.totalorder %s29, 0
      %p127 = por %p125, %p126
      %s128 = ssub.s32 %s32, %s41
      %p129 = scmp.eq.s32.totalorder %s128, 0
      %s131 = sadd.s32 %s130, 1
      %s132 = scalar_select %p129, %s130, %s131
      %p135 = pneg %p129
      %p136 = scmp.eq.s32.totalorder %s23, 1
      %p137 = por %p135, %p136
      %p138 = scmp.ne.s32.totalorder %s130, %s133
      %p139 = scmp.eq.s32.totalorder %s23, 0
      %p140 = por %p138, %p139
      %p141 = scmp.ne.s32.totalorder %s130, %s133
      %p142 = scmp.eq.s32.totalorder %s28, 1
      %p143 = por %p141, %p142
      %p144 = scmp.ne.s32.totalorder %s133, %s134
      %p145 = scmp.eq.s32.totalorder %s28, 0
      %p146 = por %p144, %p145
      %p147 = scmp.ne.s32.totalorder %s133, %s134
      %p148 = scmp.eq.s32.totalorder %s29, 1
      %p149 = por %p147, %p148
      %p151 = scmp.ne.s32.totalorder %s134, %s150
      %p152 = scmp.eq.s32.totalorder %s29, 0
      %p153 = por %p151, %p152
      %s154 = ssub.s32 %s32, %s41
      %p155 = scmp.eq.s32.totalorder %s154, 0
      %s157 = sadd.s32 %s156, 1
      %s158 = scalar_select %p155, %s156, %s157
      %p161 = pneg %p155
      %p162 = scmp.eq.s32.totalorder %s23, 1
      %p163 = por %p161, %p162
      %p164 = scmp.ne.s32.totalorder %s156, %s159
      %p165 = scmp.eq.s32.totalorder %s23, 0
      %p166 = por %p164, %p165
      %p167 = scmp.ne.s32.totalorder %s156, %s159
      %p168 = scmp.eq.s32.totalorder %s28, 1
      %p169 = por %p167, %p168
      %p170 = scmp.ne.s32.totalorder %s159, %s160
      %p171 = scmp.eq.s32.totalorder %s28, 0
      %p172 = por %p170, %p171
      %p173 = scmp.ne.s32.totalorder %s159, %s160
      %p174 = scmp.eq.s32.totalorder %s29, 1
      %p175 = por %p173, %p174
      %p177 = scmp.ne.s32.totalorder %s160, %s176
      %p178 = scmp.eq.s32.totalorder %s29, 0
      %p179 = por %p177, %p178
      %s180 = ssub.s32 %s32, %s41
      %p181 = scmp.eq.s32.totalorder %s180, 0
      %s183 = sadd.s32 %s182, 1
      %s184 = scalar_select %p181, %s182, %s183
      %p187 = pneg %p181
      %p188 = scmp.eq.s32.totalorder %s23, 1
      %p189 = por %p187, %p188
      %p190 = scmp.ne.s32.totalorder %s182, %s185
      %p191 = scmp.eq.s32.totalorder %s23, 0
      %p192 = por %p190, %p191
      %p193 = scmp.ne.s32.totalorder %s182, %s185
      %p194 = scmp.eq.s32.totalorder %s28, 1
      %p195 = por %p193, %p194
      %p196 = scmp.ne.s32.totalorder %s185, %s186
      %p197 = scmp.eq.s32.totalorder %s28, 0
      %p198 = por %p196, %p197
      %p199 = scmp.ne.s32.totalorder %s185, %s186
      %p200 = scmp.eq.s32.totalorder %s29, 1
      %p201 = por %p199, %p200
      %p203 = scmp.ne.s32.totalorder %s186, %s202
      %p204 = scmp.eq.s32.totalorder %s29, 0
      %p205 = por %p203, %p204
      %s206 = ssub.s32 %s32, %s41
      %p207 = scmp.eq.s32.totalorder %s206, 0
      %s209 = sadd.s32 %s208, 1
      %s210 = scalar_select %p207, %s208, %s209
      %p213 = pneg %p207
      %p214 = scmp.eq.s32.totalorder %s23, 1
      %p215 = por %p213, %p214
      %p216 = scmp.ne.s32.totalorder %s208, %s211
      %p217 = scmp.eq.s32.totalorder %s23, 0
      %p218 = por %p216, %p217
      %p219 = scmp.ne.s32.totalorder %s208, %s211
      %p220 = scmp.eq.s32.totalorder %s28, 1
      %p221 = por %p219, %p220
      %p222 = scmp.ne.s32.totalorder %s211, %s212
      %p223 = scmp.eq.s32.totalorder %s28, 0
      %p224 = por %p222, %p223
      %p225 = scmp.ne.s32.totalorder %s211, %s212
      %p226 = scmp.eq.s32.totalorder %s29, 1
      %p227 = por %p225, %p226
      %p229 = scmp.ne.s32.totalorder %s212, %s228
      %p230 = scmp.eq.s32.totalorder %s29, 0
      %p231 = por %p229, %p230
      %s232 = ssub.s32 %s32, %s41
      %p233 = scmp.eq.s32.totalorder %s232, 0
      %s235 = sadd.s32 %s234, 1
      %s236 = scalar_select %p233, %s234, %s235
      %p239 = pneg %p233
      %p240 = scmp.eq.s32.totalorder %s23, 1
      %p241 = por %p239, %p240
      %p242 = scmp.ne.s32.totalorder %s234, %s237
      %p243 = scmp.eq.s32.totalorder %s23, 0
      %p244 = por %p242, %p243
      %p245 = scmp.ne.s32.totalorder %s234, %s237
      %p246 = scmp.eq.s32.totalorder %s28, 1
      %p247 = por %p245, %p246
      %p248 = scmp.ne.s32.totalorder %s237, %s238
      %p249 = scmp.eq.s32.totalorder %s28, 0
      %p250 = por %p248, %p249
      %p251 = scmp.ne.s32.totalorder %s237, %s238
      %p252 = scmp.eq.s32.totalorder %s29, 1
      %p253 = por %p251, %p252
      %p255 = scmp.ne.s32.totalorder %s238, %s254
      %p256 = scmp.eq.s32.totalorder %s29, 0
      %p257 = por %p255, %p256
      %s259 = sadd.s32 %s258, 1
      %p262 = scmp.eq.s32.totalorder %s23, 1
      %p263 = scmp.ne.s32.totalorder %s258, %s260
      %p264 = scmp.eq.s32.totalorder %s23, 0
      %p265 = por %p263, %p264
      %p266 = scmp.ne.s32.totalorder %s258, %s260
      %p267 = scmp.eq.s32.totalorder %s28, 1
      %p268 = por %p266, %p267
      %p269 = scmp.ne.s32.totalorder %s260, %s261
      %p270 = scmp.eq.s32.totalorder %s28, 0
      %p271 = por %p269, %p270
      %p272 = scmp.ne.s32.totalorder %s260, %s261
      %p273 = scmp.eq.s32.totalorder %s29, 1
      %p274 = por %p272, %p273
      %p276 = scmp.ne.s32.totalorder %s261, %s275
      %p277 = scmp.eq.s32.totalorder %s29, 0
      %p278 = por %p276, %p277
      %s279 = ssub.s32 %s30, %s49
      %s280 = ssub.s32 %s31, %s45
      %s281 = sor.u32 %s279, %s280
      %p282 = scmp.eq.s32.totalorder %s281, 0
      %s284 = sadd.s32 %s283, 1
      %s285 = scalar_select %p282, %s283, %s284
      %p288 = pneg %p282
      %p289 = scmp.eq.s32.totalorder %s23, 1
      %p290 = por %p288, %p289
      %p291 = scmp.ne.s32.totalorder %s283, %s286
      %p292 = scmp.eq.s32.totalorder %s23, 0
      %p293 = por %p291, %p292
      %p294 = scmp.ne.s32.totalorder %s283, %s286
      %p295 = scmp.eq.s32.totalorder %s28, 1
      %p296 = por %p294, %p295
      %p297 = scmp.ne.s32.totalorder %s286, %s287
      %p298 = scmp.eq.s32.totalorder %s28, 0
      %p299 = por %p297, %p298
      %p300 = scmp.ne.s32.totalorder %s286, %s287
      %p301 = scmp.eq.s32.totalorder %s29, 1
      %p302 = por %p300, %p301
      %p304 = scmp.ne.s32.totalorder %s287, %s303
      %p305 = scmp.eq.s32.totalorder %s29, 0
      %p306 = por %p304, %p305
      %p307 = scmp.le.s32.totalorder 1, %s23
      %p308 = scmp.lt.s32.totalorder %s23, 3
      %p309 = pnand %p307, %p308
      %p310 = pneg %p309
      // Predicated region
      $region9: #{tpu_custom_call.1} parent=5 // pred_check
        _
      $region10: #{tpu_custom_call.1} parent=5 // pred_check_branch
        %312 = sbr.rel (%p309) target = $region12
      $region11: #{tpu_custom_call.1} parent=5 // pred_region
        %s313 = ssub.s32 %s23, 1
        // Predicated region
        $region13: #{tpu_custom_call.1} parent=11 // pred_check
          %p314 = pneg %p94
        $region14: #{tpu_custom_call.1} parent=11 // pred_check_branch
          %316 = sbr.rel (%p314) target = $region16
        $region15: #{tpu_custom_call.1} parent=11 // pred_region
          %s318 = ssub.s32 256, 256
          %319 = vsyncadd [#allocation7], %s318
          %s320 = smul.addr %s35, 4
          %s321 = smul.addr %s320, 64
          %s322 = scalar_lea.hbm %s1, %s321
          %s323 = sshll.u32 [#allocation6], 4
          %s324 = int_to_ptr.vmem [resolvable:$true] %s323
          %329 = dma.hbm_to_vmem [thread:$0]  %s322, 256, %s324, [#allocation7], 64, 64, 4
        $region16: #{tpu_custom_call.1} parent=11 // pred_fallthru
          _
        // Predicated region
        $region17: #{tpu_custom_call.1} parent=11 // pred_check
          %p330 = pneg %p120
        $region18: #{tpu_custom_call.1} parent=11 // pred_check_branch
          %332 = sbr.rel (%p330) target = $region20
        $region19: #{tpu_custom_call.1} parent=11 // pred_region
          %s334 = ssub.s32 256, 256
          %335 = vsyncadd [#allocation7], %s334
          %s336 = smul.addr %s35, 4
          %s337 = smul.addr %s336, 64
          %s338 = scalar_lea.hbm %s2, %s337
          %s339 = sshll.u32 [#allocation8], 4
          %s340 = int_to_ptr.vmem [resolvable:$true] %s339
          %345 = dma.hbm_to_vmem [thread:$0]  %s338, 256, %s340, [#allocation7], 64, 64, 4
        $region20: #{tpu_custom_call.1} parent=11 // pred_fallthru
          _
        // Predicated region
        $region21: #{tpu_custom_call.1} parent=11 // pred_check
          %p346 = pneg %p146
        $region22: #{tpu_custom_call.1} parent=11 // pred_check_branch
          %348 = sbr.rel (%p346) target = $region24
        $region23: #{tpu_custom_call.1} parent=11 // pred_region
          %s350 = ssub.s32 256, 256
          %351 = vsyncadd [#allocation10], %s350
          %s352 = smul.addr %s35, 4
          %s353 = smul.addr %s352, 64
          %s354 = scalar_lea.hbm %s3, %s353
          %s355 = sshll.u32 [#allocation9], 4
          %s356 = int_to_ptr.vmem [resolvable:$true] %s355
          %361 = dma.hbm_to_vmem [thread:$0]  %s354, 256, %s356, [#allocation10], 64, 64, 4
        $region24: #{tpu_custom_call.1} parent=11 // pred_fallthru
          _
        // Predicated region
        $region25: #{tpu_custom_call.1} parent=11 // pred_check
          %p362 = pneg %p172
        $region26: #{tpu_custom_call.1} parent=11 // pred_check_branch
          %364 = sbr.rel (%p362) target = $region28
        $region27: #{tpu_custom_call.1} parent=11 // pred_region
          %s366 = ssub.s32 256, 256
          %367 = vsyncadd [#allocation10], %s366
          %s368 = smul.addr %s35, 4
          %s369 = smul.addr %s368, 64
          %s370 = scalar_lea.hbm %s4, %s369
          %s371 = sshll.u32 [#allocation11], 4
          %s372 = int_to_ptr.vmem [resolvable:$true] %s371
          %377 = dma.hbm_to_vmem [thread:$0]  %s370, 256, %s372, [#allocation10], 64, 64, 4
        $region28: #{tpu_custom_call.1} parent=11 // pred_fallthru
          _
        // Predicated region
        $region29: #{tpu_custom_call.1} parent=11 // pred_check
          %p378 = pneg %p198
        $region30: #{tpu_custom_call.1} parent=11 // pred_check_branch
          %380 = sbr.rel (%p378) target = $region32
        $region31: #{tpu_custom_call.1} parent=11 // pred_region
          %p381 = scmp.lt.s32.totalorder %s35, 0
          %s382 = scalar_select %p381, %s35, 0
          %s383 = scalar_lea.vmem %s5, %s382
        $region32: #{tpu_custom_call.1} parent=11 // pred_fallthru
          _
        // Predicated region
        $region33: #{tpu_custom_call.1} parent=11 // pred_check
          %p384 = pneg %p224
        $region34: #{tpu_custom_call.1} parent=11 // pred_check_branch
          %386 = sbr.rel (%p384) target = $region36
        $region35: #{tpu_custom_call.1} parent=11 // pred_region
          %p387 = scmp.lt.s32.totalorder %s35, 0
          %s388 = scalar_select %p387, %s35, 0
          %s389 = scalar_lea.vmem %s6, %s388
        $region36: #{tpu_custom_call.1} parent=11 // pred_fallthru
          _
        // Predicated region
        $region37: #{tpu_custom_call.1} parent=11 // pred_check
          %p390 = pneg %p250
        $region38: #{tpu_custom_call.1} parent=11 // pred_check_branch
          %392 = sbr.rel (%p390) target = $region40
        $region39: #{tpu_custom_call.1} parent=11 // pred_region
          %p393 = scmp.lt.s32.totalorder %s35, 0
          %s394 = scalar_select %p393, %s35, 0
          %s395 = scalar_lea.vmem %s7, %s394
        $region40: #{tpu_custom_call.1} parent=11 // pred_fallthru
          _
        // Predicated region
        $region41: #{tpu_custom_call.1} parent=11 // pred_check
          %p396 = pneg %p271
        $region42: #{tpu_custom_call.1} parent=11 // pred_check_branch
          %398 = sbr.rel (%p396) target = $region44
        $region43: #{tpu_custom_call.1} parent=11 // pred_region
          _
        $region44: #{tpu_custom_call.1} parent=11 // pred_fallthru
          _
      $region12: #{tpu_custom_call.1} parent=5 // pred_fallthru
        _
      %p399 = scmp.lt.s32.totalorder %s23, 2
      // Predicated region
      $region45: #{tpu_custom_call.1} parent=5 // pred_check
        %p400 = pneg %p399
      $region46: #{tpu_custom_call.1} parent=5 // pred_check_branch
        %402 = sbr.rel (%p400) target = $region48
      $region47: #{tpu_custom_call.1} parent=5 // pred_region
        // Predicated region
        $region49: #{tpu_custom_call.1} parent=47 // pred_check
          %p403 = pneg %p62
        $region50: #{tpu_custom_call.1} parent=47 // pred_check_branch
          %405 = sbr.rel (%p403) target = $region52
        $region51: #{tpu_custom_call.1} parent=47 // pred_region
          %s406 = sand.u32 %s52, 1
          %s407 = scalar_lea.sflag [#allocation4], %s406
          %s408 = sand.u32 %s52, 1
          %s409 = smul.addr %s408, 4
          %s410 = scalar_lea.vmem [#allocation3], %s409
          %s412 = ssub.s32 64, 64
          %413 = vsyncadd %s407, %s412
          %s414 = smul.addr %s30, 64
          %s415 = scalar_lea.hbm %s0, %s414
          %s417 = sshll.u32 %s410, 4
          %s418 = int_to_ptr.vmem [resolvable:$true] %s417
          %420 = dma.hbm_to_vmem [thread:$0]  %s415, 64, %s418, %s407
        $region52: #{tpu_custom_call.1} parent=47 // pred_fallthru
          _
      $region48: #{tpu_custom_call.1} parent=5 // pred_fallthru
        _
      %p421 = scmp.le.s32.totalorder 1, %s23
      %p422 = scmp.lt.s32.totalorder %s23, 3
      %p423 = pnand %p421, %p422
      %p424 = pneg %p423
      // Predicated region
      $region53: #{tpu_custom_call.1} parent=5 // pred_check
        _
      $region54: #{tpu_custom_call.1} parent=5 // pred_check_branch
        %426 = sbr.rel (%p423) target = $region56
      $region55: #{tpu_custom_call.1} parent=5 // pred_region
        %s427 = ssub.s32 %s23, 1
        %s428 = sand.u32 %s55, 1
        %s429 = scalar_lea.sflag [#allocation4], %s428
        %s430 = sand.u32 %s55, 1
        %s431 = smul.addr %s430, 4
        %s432 = scalar_lea.vmem [#allocation3], %s431
        // Predicated region
        $region57: #{tpu_custom_call.1} parent=55 // pred_check
          %p433 = pneg %p68
        $region58: #{tpu_custom_call.1} parent=55 // pred_check_branch
          %435 = sbr.rel (%p433) target = $region60
        $region59: #{tpu_custom_call.1} parent=55 // pred_region
          %436 = dma.done %s429, 64
        $region60: #{tpu_custom_call.1} parent=55 // pred_fallthru
          _
        // Predicated region
        $region61: #{tpu_custom_call.1} parent=55 // pred_check
          %p437 = pneg %p94
        $region62: #{tpu_custom_call.1} parent=55 // pred_check_branch
          %439 = sbr.rel (%p437) target = $region64
        $region63: #{tpu_custom_call.1} parent=55 // pred_region
          %440 = dma.done [#allocation7], 256
        $region64: #{tpu_custom_call.1} parent=55 // pred_fallthru
          _
        // Predicated region
        $region65: #{tpu_custom_call.1} parent=55 // pred_check
          %p441 = pneg %p120
        $region66: #{tpu_custom_call.1} parent=55 // pred_check_branch
          %443 = sbr.rel (%p441) target = $region68
        $region67: #{tpu_custom_call.1} parent=55 // pred_region
          %444 = dma.done [#allocation7], 256
        $region68: #{tpu_custom_call.1} parent=55 // pred_fallthru
          _
        // Predicated region
        $region69: #{tpu_custom_call.1} parent=55 // pred_check
          %p445 = pneg %p146
        $region70: #{tpu_custom_call.1} parent=55 // pred_check_branch
          %447 = sbr.rel (%p445) target = $region72
        $region71: #{tpu_custom_call.1} parent=55 // pred_region
          %448 = dma.done [#allocation10], 256
        $region72: #{tpu_custom_call.1} parent=55 // pred_fallthru
          _
        // Predicated region
        $region73: #{tpu_custom_call.1} parent=55 // pred_check
          %p449 = pneg %p172
        $region74: #{tpu_custom_call.1} parent=55 // pred_check_branch
          %451 = sbr.rel (%p449) target = $region76
        $region75: #{tpu_custom_call.1} parent=55 // pred_region
          %452 = dma.done [#allocation10], 256
        $region76: #{tpu_custom_call.1} parent=55 // pred_fallthru
          _
        %s453 = sand.u32 %s55, 1
        %s454 = scalar_lea.sflag [#allocation4], %s453
        %s455 = sand.u32 %s55, 1
        %s456 = smul.addr %s455, 4
        %s457 = scalar_lea.vmem [#allocation3], %s456
        %p458 = pneg %p68
        %p459 = pneg %p65
        %p460 = pneg %p94
        %p461 = pneg %p91
        %p462 = pneg %p120
        %p463 = pneg %p117
        %p464 = pneg %p146
        %p465 = pneg %p143
        %p466 = pneg %p172
        %p467 = pneg %p169
        %p468 = scmp.lt.s32.totalorder %s35, 0
        %s469 = scalar_select %p468, %s35, 0
        %s470 = scalar_lea.vmem %s5, %s469
        %p471 = pneg %p198
        %p472 = pneg %p195
        %p473 = scmp.lt.s32.totalorder %s35, 0
        %s474 = scalar_select %p473, %s35, 0
        %s475 = scalar_lea.vmem %s6, %s474
        %p476 = pneg %p224
        %p477 = pneg %p221
        %p478 = scmp.lt.s32.totalorder %s35, 0
        %s479 = scalar_select %p478, %s35, 0
        %s480 = scalar_lea.vmem %s7, %s479
        %p481 = pneg %p250
        %p482 = pneg %p247
        %p483 = pneg %p271
        %p484 = pneg %p268
        %p485 = pneg %p299
        %p486 = pneg %p296
        %s487 = sand.u32 %s286, 1
        %s488 = scalar_lea.sflag [#allocation5], %s487
        %s489 = sand.u32 %s286, 1
        %s490 = smul.addr %s489, 8
        %s491 = scalar_lea.vmem [#allocation12], %s490
        %p492 = scmp.lt.s32.totalorder %s35, 0
        %s493 = scalar_select %p492, %s35, 0
        %s494 = scalar_lea.vmem %s5, %s493
        %p495 = scmp.lt.s32.totalorder %s35, 0
        %s496 = scalar_select %p495, %s35, 0
        %s497 = scalar_lea.vmem %s6, %s496
        %p498 = scmp.lt.s32.totalorder %s35, 0
        %s499 = scalar_select %p498, %s35, 0
        %s500 = scalar_lea.vmem %s7, %s499
        %p502 = scmp.eq.s32.totalorder %s35, 0
        // Predicated region
        $region77: #{tpu_custom_call.1} parent=55 // pred_check
          %p503 = pneg %p502
        $region78: #{tpu_custom_call.1} parent=55 // pred_check_branch
          %505 = sbr.rel (%p503) target = $region80
        $region79: #{tpu_custom_call.1} parent=55 // pred_region
          %vm506 = vcmask 261120
          %507 = vst.msk [vmem:[#allocation2] sm:$0xff] %vm506, 0.0
        $region80: #{tpu_custom_call.1} parent=55 // pred_fallthru
          _
        %v508 = vld [vmem:[#allocation6] sm:$0xf]
        %v509 = vld [vmem:[#allocation6 + $0x4] sm:$0xf]
        %v510 = vld [vmem:[#allocation6 + $0x8] sm:$0xf]
        %v511 = vld [vmem:[#allocation6 + $0xc] sm:$0xf]
        %v512 = vld [vmem:[#allocation8] sm:$0xf]
        %v513 = vld [vmem:[#allocation8 + $0x4] sm:$0xf]
        %v514 = vld [vmem:[#allocation8 + $0x8] sm:$0xf]
        %v515 = vld [vmem:[#allocation8 + $0xc] sm:$0xf]
        %v516 = vld [vmem:[#allocation9] sm:$0xf]
        %v517 = vld [vmem:[#allocation9 + $0x4] sm:$0xf]
        %v518 = vld [vmem:[#allocation9 + $0x8] sm:$0xf]
        %v519 = vld [vmem:[#allocation9 + $0xc] sm:$0xf]
        %v520 = vld [vmem:[#allocation11] sm:$0xf]
        %v521 = vld [vmem:[#allocation11 + $0x4] sm:$0xf]
        %v522 = vld [vmem:[#allocation11 + $0x8] sm:$0xf]
        %v523 = vld [vmem:[#allocation11 + $0xc] sm:$0xf]
        %v524 = vld [vmem:[%s432] sm:$0xf]
        %v525 = vld [vmem:[%s494] sm:$0x1]
        %v527 = vlaneseq
        %v528 = vshrl.u32 %v527, 7
        %v529 = vsub.s32 0, %v528
        %v530 = vrot.slane %v525, %v529
        %v536 = vunpack.c.l.b16 %v508
        %v537 = vunpack.c.l.b16 %v509
        %v538 = vunpack.c.l.b16 %v510
        %v539 = vunpack.c.l.b16 %v511
        %v540 = vpack.c.b16 %v537, %v536
        %v541 = vpack.c.b16 %v539, %v538
        %vm544 = vcmask 261120
        %v546 = vsel %vm544, %v524, 0
        %548 = vmatprep.subr.bf16.mxu0 0
        %549 = vmatpush1.bf16.msra.mxu0 %v540
        %550 = vmatprep.subr.bf16.mxu0 0
        %551 = vmatpush1.bf16.msra.mxu0 %v541
        %552 = vmatprep.subr.bf16.mxu0 0
        %553 = vmatpush1.bf16.msra.mxu0 0
        %554 = vmatprep.subr.bf16.mxu0 0
        %555 = vmatpush1.bf16.msra.mxu0 0
        %556 = vmatprep.subr.bf16.mxu0 0
        %557 = vmatpush1.bf16.msra.mxu0 0
        %558 = vmatprep.subr.bf16.mxu0 0
        %559 = vmatpush1.bf16.msra.mxu0 0
        %560 = vmatprep.subr.bf16.mxu0 0
        %561 = vmatpush1.bf16.msra.mxu0 0
        %562 = vmatprep.subr.bf16.mxu0 0
        %563 = vmatpush1.bf16.msra.mxu0 0
        %564 = vmatprep.subr.bf16.mxu0 0
        %565 = vmatpush1.bf16.msra.mxu0 0
        %566 = vmatprep.subr.bf16.mxu0 0
        %567 = vmatpush1.bf16.msra.mxu0 0
        %568 = vmatprep.subr.bf16.mxu0 0
        %569 = vmatpush1.bf16.msra.mxu0 0
        %570 = vmatprep.subr.bf16.mxu0 0
        %571 = vmatpush1.bf16.msra.mxu0 0
        %572 = vmatprep.subr.bf16.mxu0 0
        %573 = vmatpush1.bf16.msra.mxu0 0
        %574 = vmatprep.subr.bf16.mxu0 0
        %575 = vmatpush1.bf16.msra.mxu0 0
        %576 = vmatprep.subr.bf16.mxu0 0
        %577 = vmatpush1.bf16.msra.mxu0 0
        %578 = vmatprep.subr.bf16.mxu0 0
        %579 = vmatpush1.bf16.msra.mxu0 0
        %580 = vmatprep.mubr.bf16.mxu0 0
        %581 = vmatmul.mubr.bf16.gmra.mrb[0].mxu0 %v546
        %v582 = vpop.f32.mrb[0].mxu0
        %v583 = vadd.f32 %v530, %v582
        %v584 = vpop.f32.mrb[0].mxu0
        %v585 = vpop.f32.mrb[0].mxu0
        %v586 = vpop.f32.mrb[0].mxu0
        %587 = vdwg.mxu0
        %v588 = vpack.c.bf16 %v583, %v583
        %v589 = vld [vmem:[%s497] sm:$0x1]
        %v591 = vlaneseq
        %v592 = vshrl.u32 %v591, 7
        %v593 = vsub.s32 0, %v592
        %v594 = vrot.slane %v589, %v593
        %v600 = vunpack.c.l.b16 %v512
        %v601 = vunpack.c.l.b16 %v513
        %v602 = vunpack.c.l.b16 %v514
        %v603 = vunpack.c.l.b16 %v515
        %v604 = vpack.c.b16 %v601, %v600
        %v605 = vpack.c.b16 %v603, %v602
        %608 = vmatprep.subr.bf16.mxu0 0
        %609 = vmatpush1.bf16.msra.mxu0 %v604
        %610 = vmatprep.subr.bf16.mxu0 0
        %611 = vmatpush1.bf16.msra.mxu0 %v605
        %612 = vmatprep.subr.bf16.mxu0 0
        %613 = vmatpush1.bf16.msra.mxu0 0
        %614 = vmatprep.subr.bf16.mxu0 0
        %615 = vmatpush1.bf16.msra.mxu0 0
        %616 = vmatprep.subr.bf16.mxu0 0
        %617 = vmatpush1.bf16.msra.mxu0 0
        %618 = vmatprep.subr.bf16.mxu0 0
        %619 = vmatpush1.bf16.msra.mxu0 0
        %620 = vmatprep.subr.bf16.mxu0 0
        %621 = vmatpush1.bf16.msra.mxu0 0
        %622 = vmatprep.subr.bf16.mxu0 0
        %623 = vmatpush1.bf16.msra.mxu0 0
        %624 = vmatprep.subr.bf16.mxu0 0
        %625 = vmatpush1.bf16.msra.mxu0 0
        %626 = vmatprep.subr.bf16.mxu0 0
        %627 = vmatpush1.bf16.msra.mxu0 0
        %628 = vmatprep.subr.bf16.mxu0 0
        %629 = vmatpush1.bf16.msra.mxu0 0
        %630 = vmatprep.subr.bf16.mxu0 0
        %631 = vmatpush1.bf16.msra.mxu0 0
        %632 = vmatprep.subr.bf16.mxu0 0
        %633 = vmatpush1.bf16.msra.mxu0 0
        %634 = vmatprep.subr.bf16.mxu0 0
        %635 = vmatpush1.bf16.msra.mxu0 0
        %636 = vmatprep.subr.bf16.mxu0 0
        %637 = vmatpush1.bf16.msra.mxu0 0
        %638 = vmatprep.subr.bf16.mxu0 0
        %639 = vmatpush1.bf16.msra.mxu0 0
        %640 = vmatprep.mubr.bf16.mxu0 0
        %641 = vmatmul.mubr.bf16.gmra.mrb[0].mxu0 %v546
        %v642 = vpop.f32.mrb[0].mxu0
        %v643 = vadd.f32 %v594, %v642
        %v644 = vpop.f32.mrb[0].mxu0
        %v645 = vpop.f32.mrb[0].mxu0
        %v646 = vpop.f32.mrb[0].mxu0
        %647 = vdwg.mxu0
        %v648 = vpack.c.bf16 %v643, %v643
        %v649 = vld [vmem:[%s500] sm:$0x1]
        %v651 = vlaneseq
        %v652 = vshrl.u32 %v651, 7
        %v653 = vsub.s32 0, %v652
        %v654 = vrot.slane %v649, %v653
        %v660 = vunpack.c.l.b16 %v516
        %v661 = vunpack.c.l.b16 %v517
        %v662 = vunpack.c.l.b16 %v518
        %v663 = vunpack.c.l.b16 %v519
        %v664 = vpack.c.b16 %v661, %v660
        %v665 = vpack.c.b16 %v663, %v662
        %668 = vmatprep.subr.bf16.mxu0 0
        %669 = vmatpush1.bf16.msra.mxu0 %v664
        %670 = vmatprep.subr.bf16.mxu0 0
        %671 = vmatpush1.bf16.msra.mxu0 %v665
        %672 = vmatprep.subr.bf16.mxu0 0
        %673 = vmatpush1.bf16.msra.mxu0 0
        %674 = vmatprep.subr.bf16.mxu0 0
        %675 = vmatpush1.bf16.msra.mxu0 0
        %676 = vmatprep.subr.bf16.mxu0 0
        %677 = vmatpush1.bf16.msra.mxu0 0
        %678 = vmatprep.subr.bf16.mxu0 0
        %679 = vmatpush1.bf16.msra.mxu0 0
        %680 = vmatprep.subr.bf16.mxu0 0
        %681 = vmatpush1.bf16.msra.mxu0 0
        %682 = vmatprep.subr.bf16.mxu0 0
        %683 = vmatpush1.bf16.msra.mxu0 0
        %684 = vmatprep.subr.bf16.mxu0 0
        %685 = vmatpush1.bf16.msra.mxu0 0
        %686 = vmatprep.subr.bf16.mxu0 0
        %687 = vmatpush1.bf16.msra.mxu0 0
        %688 = vmatprep.subr.bf16.mxu0 0
        %689 = vmatpush1.bf16.msra.mxu0 0
        %690 = vmatprep.subr.bf16.mxu0 0
        %691 = vmatpush1.bf16.msra.mxu0 0
        %692 = vmatprep.subr.bf16.mxu0 0
        %693 = vmatpush1.bf16.msra.mxu0 0
        %694 = vmatprep.subr.bf16.mxu0 0
        %695 = vmatpush1.bf16.msra.mxu0 0
        %696 = vmatprep.subr.bf16.mxu0 0
        %697 = vmatpush1.bf16.msra.mxu0 0
        %698 = vmatprep.subr.bf16.mxu0 0
        %699 = vmatpush1.bf16.msra.mxu0 0
        %700 = vmatprep.mubr.bf16.mxu0 0
        %701 = vmatmul.mubr.bf16.gmra.mrb[0].mxu0 %v546
        %v702 = vpop.f32.mrb[0].mxu0
        %v703 = vadd.f32 %v654, %v702
        %v704 = vpop.f32.mrb[0].mxu0
        %v705 = vpop.f32.mrb[0].mxu0
        %v706 = vpop.f32.mrb[0].mxu0
        %707 = vdwg.mxu0
        %v708 = vpack.c.bf16 %v703, %v703
        %vm709 = vcmask 64512
        %v711 = vsel %vm709, %v588, 0
        %v714 = vsel %vm709, %v648, 0
        %716 = vmatprep.subr.bf16.mxu0 0
        %717 = vmatpush1.bf16.xpose.msra.mxu0 %v714
        %718 = vmatprep.subr.bf16.mxu0 0
        %719 = vmatpush1.bf16.xpose.msra.mxu0 0
        %720 = vmatprep.subr.bf16.mxu0 0
        %721 = vmatpush1.bf16.xpose.msra.mxu0 0
        %722 = vmatprep.subr.bf16.mxu0 0
        %723 = vmatpush1.bf16.xpose.msra.mxu0 0
        %724 = vmatprep.subr.bf16.mxu0 0
        %725 = vmatpush1.bf16.xpose.msra.mxu0 0
        %726 = vmatprep.subr.bf16.mxu0 0
        %727 = vmatpush1.bf16.xpose.msra.mxu0 0
        %728 = vmatprep.subr.bf16.mxu0 0
        %729 = vmatpush1.bf16.xpose.msra.mxu0 0
        %730 = vmatprep.subr.bf16.mxu0 0
        %731 = vmatpush1.bf16.xpose.msra.mxu0 0
        %732 = vmatprep.subr.bf16.mxu0 0
        %733 = vmatpush1.bf16.xpose.msra.mxu0 0
        %734 = vmatprep.subr.bf16.mxu0 0
        %735 = vmatpush1.bf16.xpose.msra.mxu0 0
        %736 = vmatprep.subr.bf16.mxu0 0
        %737 = vmatpush1.bf16.xpose.msra.mxu0 0
        %738 = vmatprep.subr.bf16.mxu0 0
        %739 = vmatpush1.bf16.xpose.msra.mxu0 0
        %740 = vmatprep.subr.bf16.mxu0 0
        %741 = vmatpush1.bf16.xpose.msra.mxu0 0
        %742 = vmatprep.subr.bf16.mxu0 0
        %743 = vmatpush1.bf16.xpose.msra.mxu0 0
        %744 = vmatprep.subr.bf16.mxu0 0
        %745 = vmatpush1.bf16.xpose.msra.mxu0 0
        %746 = vmatprep.subr.bf16.mxu0 0
        %747 = vmatpush1.bf16.xpose.msra.mxu0 0
        %748 = vmatprep.mubr.bf16.mxu0 0
        %749 = vmatmul.mubr.bf16.gmra.mrb[0].mxu0 %v711
        %v750 = vpop.f32.mrb[0].mxu0
        %v751 = vadd.f32 0.0, %v750
        %v752 = vpop.f32.mrb[0].mxu0
        %v753 = vpop.f32.mrb[0].mxu0
        %v754 = vpop.f32.mrb[0].mxu0
        %755 = vdwg.mxu0
        %v756 = vsel %vm709, %v751, -inf
        %757 = vmax.xlane.f32.xlu0 %v756
        %v758 = vpop.xlane.xlu0 %757
        %v759 = vsub.f32 %v751, %v758
        %v760 = vmul.f32 %v759, 1.442695
        %v761 = vpow.pop %v760
        %v762 = vsel %vm709, %v761, 0.0
        %763 = vadd.xlane.f32.xlu0 %v762
        %v764 = vpop.xlane.xlu0 %763
        %v765 = vpack.c.bf16 %v761, %v761
        %v767 = vsel %vm709, %v765, 0
        %vm769 = vcmask 1043456
        %v771 = vsel %vm769, %v708, 0
        %773 = vmatprep.subr.bf16.mxu0 0
        %774 = vmatpush1.bf16.msra.mxu0 %v771
        %775 = vmatprep.subr.bf16.mxu0 0
        %776 = vmatpush1.bf16.msra.mxu0 0
        %777 = vmatprep.subr.bf16.mxu0 0
        %778 = vmatpush1.bf16.msra.mxu0 0
        %779 = vmatprep.subr.bf16.mxu0 0
        %780 = vmatpush1.bf16.msra.mxu0 0
        %781 = vmatprep.subr.bf16.mxu0 0
        %782 = vmatpush1.bf16.msra.mxu0 0
        %783 = vmatprep.subr.bf16.mxu0 0
        %784 = vmatpush1.bf16.msra.mxu0 0
        %785 = vmatprep.subr.bf16.mxu0 0
        %786 = vmatpush1.bf16.msra.mxu0 0
        %787 = vmatprep.subr.bf16.mxu0 0
        %788 = vmatpush1.bf16.msra.mxu0 0
        %789 = vmatprep.subr.bf16.mxu0 0
        %790 = vmatpush1.bf16.msra.mxu0 0
        %791 = vmatprep.subr.bf16.mxu0 0
        %792 = vmatpush1.bf16.msra.mxu0 0
        %793 = vmatprep.subr.bf16.mxu0 0
        %794 = vmatpush1.bf16.msra.mxu0 0
        %795 = vmatprep.subr.bf16.mxu0 0
        %796 = vmatpush1.bf16.msra.mxu0 0
        %797 = vmatprep.subr.bf16.mxu0 0
        %798 = vmatpush1.bf16.msra.mxu0 0
        %799 = vmatprep.subr.bf16.mxu0 0
        %800 = vmatpush1.bf16.msra.mxu0 0
        %801 = vmatprep.subr.bf16.mxu0 0
        %802 = vmatpush1.bf16.msra.mxu0 0
        %803 = vmatprep.subr.bf16.mxu0 0
        %804 = vmatpush1.bf16.msra.mxu0 0
        %805 = vmatprep.mubr.bf16.mxu0 0
        %806 = vmatmul.mubr.bf16.gmra.mrb[0].mxu0 %v767
        %v807 = vpop.f32.mrb[0].mxu0
        %v808 = vadd.f32 0.0, %v807
        %v809 = vpop.f32.mrb[0].mxu0
        %v810 = vpop.f32.mrb[0].mxu0
        %v811 = vpop.f32.mrb[0].mxu0
        %812 = vdwg.mxu0
        %v813 = vrcp.pop %v764
        %v814 = vmul.f32 %v808, %v813
        %v815 = vld [vmem:[#allocation2] sm:$0xff]
        %v816 = vpack.c.bf16 %v814, %v814
        %v818 = vsel %vm709, %v816, 0
        %v821 = vsel %vm769, %v520, 0
        %823 = vmatprep.subr.bf16.mxu0 0
        %824 = vmatpush1.bf16.msra.mxu0 %v821
        %825 = vmatprep.subr.bf16.mxu0 0
        %826 = vmatpush1.bf16.msra.mxu0 0
        %827 = vmatprep.subr.bf16.mxu0 0
        %828 = vmatpush1.bf16.msra.mxu0 0
        %829 = vmatprep.subr.bf16.mxu0 0
        %830 = vmatpush1.bf16.msra.mxu0 0
        %831 = vmatprep.subr.bf16.mxu0 0
        %832 = vmatpush1.bf16.msra.mxu0 0
        %833 = vmatprep.subr.bf16.mxu0 0
        %834 = vmatpush1.bf16.msra.mxu0 0
        %835 = vmatprep.subr.bf16.mxu0 0
        %836 = vmatpush1.bf16.msra.mxu0 0
        %837 = vmatprep.subr.bf16.mxu0 0
        %838 = vmatpush1.bf16.msra.mxu0 0
        %839 = vmatprep.subr.bf16.mxu0 0
        %840 = vmatpush1.bf16.msra.mxu0 0
        %841 = vmatprep.subr.bf16.mxu0 0
        %842 = vmatpush1.bf16.msra.mxu0 0
        %843 = vmatprep.subr.bf16.mxu0 0
        %844 = vmatpush1.bf16.msra.mxu0 0
        %845 = vmatprep.subr.bf16.mxu0 0
        %846 = vmatpush1.bf16.msra.mxu0 0
        %847 = vmatprep.subr.bf16.mxu0 0
        %848 = vmatpush1.bf16.msra.mxu0 0
        %849 = vmatprep.subr.bf16.mxu0 0
        %850 = vmatpush1.bf16.msra.mxu0 0
        %851 = vmatprep.subr.bf16.mxu0 0
        %852 = vmatpush1.bf16.msra.mxu0 0
        %853 = vmatprep.subr.bf16.mxu0 0
        %854 = vmatpush1.bf16.msra.mxu0 0
        %855 = vmatprep.mubr.bf16.mxu0 0
        %856 = vmatmul.mubr.bf16.gmra.mrb[0].mxu0 %v818
        %v857 = vpop.f32.mrb[0].mxu0
        %v858 = vadd.f32 0.0, %v857
        %v859 = vpop.f32.mrb[0].mxu0
        %v860 = vpop.f32.mrb[0].mxu0
        %v861 = vpop.f32.mrb[0].mxu0
        %862 = vdwg.mxu0
        %v863 = vadd.f32 %v815, %v858
        %864 = vst.msk [vmem:[#allocation2] sm:$0xff] %vm544, %v863
        %866 = vrot.lane.b32.xlu0 %v588, 120
        %v867 = vpop.permute.xlu0 %866
        %869 = vrot.lane.b32.xlu0 %v648, 120
        %v870 = vpop.permute.xlu0 %869
        %v872 = vsel %vm709, %v867, 0
        %v875 = vsel %vm709, %v870, 0
        %877 = vmatprep.subr.bf16.mxu0 0
        %878 = vmatpush1.bf16.xpose.msra.mxu0 %v875
        %879 = vmatprep.subr.bf16.mxu0 0
        %880 = vmatpush1.bf16.xpose.msra.mxu0 0
        %881 = vmatprep.subr.bf16.mxu0 0
        %882 = vmatpush1.bf16.xpose.msra.mxu0 0
        %883 = vmatprep.subr.bf16.mxu0 0
        %884 = vmatpush1.bf16.xpose.msra.mxu0 0
        %885 = vmatprep.subr.bf16.mxu0 0
        %886 = vmatpush1.bf16.xpose.msra.mxu0 0
        %887 = vmatprep.subr.bf16.mxu0 0
        %888 = vmatpush1.bf16.xpose.msra.mxu0 0
        %889 = vmatprep.subr.bf16.mxu0 0
        %890 = vmatpush1.bf16.xpose.msra.mxu0 0
        %891 = vmatprep.subr.bf16.mxu0 0
        %892 = vmatpush1.bf16.xpose.msra.mxu0 0
        %893 = vmatprep.subr.bf16.mxu0 0
        %894 = vmatpush1.bf16.xpose.msra.mxu0 0
        %895 = vmatprep.subr.bf16.mxu0 0
        %896 = vmatpush1.bf16.xpose.msra.mxu0 0
        %897 = vmatprep.subr.bf16.mxu0 0
        %898 = vmatpush1.bf16.xpose.msra.mxu0 0
        %899 = vmatprep.subr.bf16.mxu0 0
        %900 = vmatpush1.bf16.xpose.msra.mxu0 0
        %901 = vmatprep.subr.bf16.mxu0 0
        %902 = vmatpush1.bf16.xpose.msra.mxu0 0
        %903 = vmatprep.subr.bf16.mxu0 0
        %904 = vmatpush1.bf16.xpose.msra.mxu0 0
        %905 = vmatprep.subr.bf16.mxu0 0
        %906 = vmatpush1.bf16.xpose.msra.mxu0 0
        %907 = vmatprep.subr.bf16.mxu0 0
        %908 = vmatpush1.bf16.xpose.msra.mxu0 0
        %909 = vmatprep.mubr.bf16.mxu0 0
        %910 = vmatmul.mubr.bf16.gmra.mrb[0].mxu0 %v872
        %v911 = vpop.f32.mrb[0].mxu0
        %v912 = vadd.f32 0.0, %v911
        %v913 = vpop.f32.mrb[0].mxu0
        %v914 = vpop.f32.mrb[0].mxu0
        %v915 = vpop.f32.mrb[0].mxu0
        %916 = vdwg.mxu0
        %v917 = vsel %vm709, %v912, -inf
        %918 = vmax.xlane.f32.xlu0 %v917
        %v919 = vpop.xlane.xlu0 %918
        %v920 = vsub.f32 %v912, %v919
        %v921 = vmul.f32 %v920, 1.442695
        %v922 = vpow.pop %v921
        %v923 = vsel %vm709, %v922, 0.0
        %924 = vadd.xlane.f32.xlu0 %v923
        %v925 = vpop.xlane.xlu0 %924
        %v926 = vpack.c.bf16 %v922, %v922
        %928 = vrot.lane.b32.xlu0 %v708, 120
        %v929 = vpop.permute.xlu0 %928
        %v931 = vsel %vm709, %v926, 0
        %v934 = vsel %vm769, %v929, 0
        %936 = vmatprep.subr.bf16.mxu0 0
        %937 = vmatpush1.bf16.msra.mxu0 %v934
        %938 = vmatprep.subr.bf16.mxu0 0
        %939 = vmatpush1.bf16.msra.mxu0 0
        %940 = vmatprep.subr.bf16.mxu0 0
        %941 = vmatpush1.bf16.msra.mxu0 0
        %942 = vmatprep.subr.bf16.mxu0 0
        %943 = vmatpush1.bf16.msra.mxu0 0
        %944 = vmatprep.subr.bf16.mxu0 0
        %945 = vmatpush1.bf16.msra.mxu0 0
        %946 = vmatprep.subr.bf16.mxu0 0
        %947 = vmatpush1.bf16.msra.mxu0 0
        %948 = vmatprep.subr.bf16.mxu0 0
        %949 = vmatpush1.bf16.msra.mxu0 0
        %950 = vmatprep.subr.bf16.mxu0 0
        %951 = vmatpush1.bf16.msra.mxu0 0
        %952 = vmatprep.subr.bf16.mxu0 0
        %953 = vmatpush1.bf16.msra.mxu0 0
        %954 = vmatprep.subr.bf16.mxu0 0
        %955 = vmatpush1.bf16.msra.mxu0 0
        %956 = vmatprep.subr.bf16.mxu0 0
        %957 = vmatpush1.bf16.msra.mxu0 0
        %958 = vmatprep.subr.bf16.mxu0 0
        %959 = vmatpush1.bf16.msra.mxu0 0
        %960 = vmatprep.subr.bf16.mxu0 0
        %961 = vmatpush1.bf16.msra.mxu0 0
        %962 = vmatprep.subr.bf16.mxu0 0
        %963 = vmatpush1.bf16.msra.mxu0 0
        %964 = vmatprep.subr.bf16.mxu0 0
        %965 = vmatpush1.bf16.msra.mxu0 0
        %966 = vmatprep.subr.bf16.mxu0 0
        %967 = vmatpush1.bf16.msra.mxu0 0
        %968 = vmatprep.mubr.bf16.mxu0 0
        %969 = vmatmul.mubr.bf16.gmra.mrb[0].mxu0 %v931
        %v970 = vpop.f32.mrb[0].mxu0
        %v971 = vadd.f32 0.0, %v970
        %v972 = vpop.f32.mrb[0].mxu0
        %v973 = vpop.f32.mrb[0].mxu0
        %v974 = vpop.f32.mrb[0].mxu0
        %975 = vdwg.mxu0
        %v976 = vrcp.pop %v925
        %v977 = vmul.f32 %v971, %v976
        %v978 = vld [vmem:[#allocation2] sm:$0xff]
        %v979 = vpack.c.bf16 %v977, %v977
        %v981 = vsel %vm709, %v979, 0
        %v984 = vsel %vm769, %v521, 0
        %986 = vmatprep.subr.bf16.mxu0 0
        %987 = vmatpush1.bf16.msra.mxu0 %v984
        %988 = vmatprep.subr.bf16.mxu0 0
        %989 = vmatpush1.bf16.msra.mxu0 0
        %990 = vmatprep.subr.bf16.mxu0 0
        %991 = vmatpush1.bf16.msra.mxu0 0
        %992 = vmatprep.subr.bf16.mxu0 0
        %993 = vmatpush1.bf16.msra.mxu0 0
        %994 = vmatprep.subr.bf16.mxu0 0
        %995 = vmatpush1.bf16.msra.mxu0 0
        %996 = vmatprep.subr.bf16.mxu0 0
        %997 = vmatpush1.bf16.msra.mxu0 0
        %998 = vmatprep.subr.bf16.mxu0 0
        %999 = vmatpush1.bf16.msra.mxu0 0
        %1000 = vmatprep.subr.bf16.mxu0 0
        %1001 = vmatpush1.bf16.msra.mxu0 0
        %1002 = vmatprep.subr.bf16.mxu0 0
        %1003 = vmatpush1.bf16.msra.mxu0 0
        %1004 = vmatprep.subr.bf16.mxu0 0
        %1005 = vmatpush1.bf16.msra.mxu0 0
        %1006 = vmatprep.subr.bf16.mxu0 0
        %1007 = vmatpush1.bf16.msra.mxu0 0
        %1008 = vmatprep.subr.bf16.mxu0 0
        %1009 = vmatpush1.bf16.msra.mxu0 0
        %1010 = vmatprep.subr.bf16.mxu0 0
        %1011 = vmatpush1.bf16.msra.mxu0 0
        %1012 = vmatprep.subr.bf16.mxu0 0
        %1013 = vmatpush1.bf16.msra.mxu0 0
        %1014 = vmatprep.subr.bf16.mxu0 0
        %1015 = vmatpush1.bf16.msra.mxu0 0
        %1016 = vmatprep.subr.bf16.mxu0 0
        %1017 = vmatpush1.bf16.msra.mxu0 0
        %1018 = vmatprep.mubr.bf16.mxu0 0
        %1019 = vmatmul.mubr.bf16.gmra.mrb[0].mxu0 %v981
        %v1020 = vpop.f32.mrb[0].mxu0
        %v1021 = vadd.f32 0.0, %v1020
        %v1022 = vpop.f32.mrb[0].mxu0
        %v1023 = vpop.f32.mrb[0].mxu0
        %v1024 = vpop.f32.mrb[0].mxu0
        %1025 = vdwg.mxu0
        %v1026 = vadd.f32 %v978, %v1021
        %1027 = vst.msk [vmem:[#allocation2] sm:$0xff] %vm544, %v1026
        %1028 = vrot.lane.b32.xlu0 %v588, 112
        %v1029 = vpop.permute.xlu0 %1028
        %1030 = vrot.lane.b32.xlu0 %v648, 112
        %v1031 = vpop.permute.xlu0 %1030
        %v1033 = vsel %vm709, %v1029, 0
        %v1036 = vsel %vm709, %v1031, 0
        %1038 = vmatprep.subr.bf16.mxu0 0
        %1039 = vmatpush1.bf16.xpose.msra.mxu0 %v1036
        %1040 = vmatprep.subr.bf16.mxu0 0
        %1041 = vmatpush1.bf16.xpose.msra.mxu0 0
        %1042 = vmatprep.subr.bf16.mxu0 0
        %1043 = vmatpush1.bf16.xpose.msra.mxu0 0
        %1044 = vmatprep.subr.bf16.mxu0 0
        %1045 = vmatpush1.bf16.xpose.msra.mxu0 0
        %1046 = vmatprep.subr.bf16.mxu0 0
        %1047 = vmatpush1.bf16.xpose.msra.mxu0 0
        %1048 = vmatprep.subr.bf16.mxu0 0
        %1049 = vmatpush1.bf16.xpose.msra.mxu0 0
        %1050 = vmatprep.subr.bf16.mxu0 0
        %1051 = vmatpush1.bf16.xpose.msra.mxu0 0
        %1052 = vmatprep.subr.bf16.mxu0 0
        %1053 = vmatpush1.bf16.xpose.msra.mxu0 0
        %1054 = vmatprep.subr.bf16.mxu0 0
        %1055 = vmatpush1.bf16.xpose.msra.mxu0 0
        %1056 = vmatprep.subr.bf16.mxu0 0
        %1057 = vmatpush1.bf16.xpose.msra.mxu0 0
        %1058 = vmatprep.subr.bf16.mxu0 0
        %1059 = vmatpush1.bf16.xpose.msra.mxu0 0
        %1060 = vmatprep.subr.bf16.mxu0 0
        %1061 = vmatpush1.bf16.xpose.msra.mxu0 0
        %1062 = vmatprep.subr.bf16.mxu0 0
        %1063 = vmatpush1.bf16.xpose.msra.mxu0 0
        %1064 = vmatprep.subr.bf16.mxu0 0
        %1065 = vmatpush1.bf16.xpose.msra.mxu0 0
        %1066 = vmatprep.subr.bf16.mxu0 0
        %1067 = vmatpush1.bf16.xpose.msra.mxu0 0
        %1068 = vmatprep.subr.bf16.mxu0 0
        %1069 = vmatpush1.bf16.xpose.msra.mxu0 0
        %1070 = vmatprep.mubr.bf16.mxu0 0
        %1071 = vmatmul.mubr.bf16.gmra.mrb[0].mxu0 %v1033
        %v1072 = vpop.f32.mrb[0].mxu0
        %v1073 = vadd.f32 0.0, %v1072
        %v1074 = vpop.f32.mrb[0].mxu0
        %v1075 = vpop.f32.mrb[0].mxu0
        %v1076 = vpop.f32.mrb[0].mxu0
        %1077 = vdwg.mxu0
        %v1078 = vsel %vm709, %v1073, -inf
        %1079 = vmax.xlane.f32.xlu0 %v1078
        %v1080 = vpop.xlane.xlu0 %1079
        %v1081 = vsub.f32 %v1073, %v1080
        %v1082 = vmul.f32 %v1081, 1.442695
        %v1083 = vpow.pop %v1082
        %v1084 = vsel %vm709, %v1083, 0.0
        %1085 = vadd.xlane.f32.xlu0 %v1084
        %v1086 = vpop.xlane.xlu0 %1085
        %v1087 = vpack.c.bf16 %v1083, %v1083
        %1088 = vrot.lane.b32.xlu0 %v708, 112
        %v1089 = vpop.permute.xlu0 %1088
        %v1091 = vsel %vm709, %v1087, 0
        %v1094 = vsel %vm769, %v1089, 0
        %1096 = vmatprep.subr.bf16.mxu0 0
        %1097 = vmatpush1.bf16.msra.mxu0 %v1094
        %1098 = vmatprep.subr.bf16.mxu0 0
        %1099 = vmatpush1.bf16.msra.mxu0 0
        %1100 = vmatprep.subr.bf16.mxu0 0
        %1101 = vmatpush1.bf16.msra.mxu0 0
        %1102 = vmatprep.subr.bf16.mxu0 0
        %1103 = vmatpush1.bf16.msra.mxu0 0
        %1104 = vmatprep.subr.bf16.mxu0 0
        %1105 = vmatpush1.bf16.msra.mxu0 0
        %1106 = vmatprep.subr.bf16.mxu0 0
        %1107 = vmatpush1.bf16.msra.mxu0 0
        %1108 = vmatprep.subr.bf16.mxu0 0
        %1109 = vmatpush1.bf16.msra.mxu0 0
        %1110 = vmatprep.subr.bf16.mxu0 0
        %1111 = vmatpush1.bf16.msra.mxu0 0
        %1112 = vmatprep.subr.bf16.mxu0 0
        %1113 = vmatpush1.bf16.msra.mxu0 0
        %1114 = vmatprep.subr.bf16.mxu0 0
        %1115 = vmatpush1.bf16.msra.mxu0 0
        %1116 = vmatprep.subr.bf16.mxu0 0
        %1117 = vmatpush1.bf16.msra.mxu0 0
        %1118 = vmatprep.subr.bf16.mxu0 0
        %1119 = vmatpush1.bf16.msra.mxu0 0
        %1120 = vmatprep.subr.bf16.mxu0 0
        %1121 = vmatpush1.bf16.msra.mxu0 0
        %1122 = vmatprep.subr.bf16.mxu0 0
        %1123 = vmatpush1.bf16.msra.mxu0 0
        %1124 = vmatprep.subr.bf16.mxu0 0
        %1125 = vmatpush1.bf16.msra.mxu0 0
        %1126 = vmatprep.subr.bf16.mxu0 0
        %1127 = vmatpush1.bf16.msra.mxu0 0
        %1128 = vmatprep.mubr.bf16.mxu0 0
        %1129 = vmatmul.mubr.bf16.gmra.mrb[0].mxu0 %v1091
        %v1130 = vpop.f32.mrb[0].mxu0
        %v1131 = vadd.f32 0.0, %v1130
        %v1132 = vpop.f32.mrb[0].mxu0
        %v1133 = vpop.f32.mrb[0].mxu0
        %v1134 = vpop.f32.mrb[0].mxu0
        %1135 = vdwg.mxu0
        %v1136 = vrcp.pop %v1086
        %v1137 = vmul.f32 %v1131, %v1136
        %v1138 = vld [vmem:[#allocation2] sm:$0xff]
        %v1139 = vpack.c.bf16 %v1137, %v1137
        %v1141 = vsel %vm709, %v1139, 0
        %v1144 = vsel %vm769, %v522, 0
        %1146 = vmatprep.subr.bf16.mxu0 0
        %1147 = vmatpush1.bf16.msra.mxu0 %v1144
        %1148 = vmatprep.subr.bf16.mxu0 0
        %1149 = vmatpush1.bf16.msra.mxu0 0
        %1150 = vmatprep.subr.bf16.mxu0 0
        %1151 = vmatpush1.bf16.msra.mxu0 0
        %1152 = vmatprep.subr.bf16.mxu0 0
        %1153 = vmatpush1.bf16.msra.mxu0 0
        %1154 = vmatprep.subr.bf16.mxu0 0
        %1155 = vmatpush1.bf16.msra.mxu0 0
        %1156 = vmatprep.subr.bf16.mxu0 0
        %1157 = vmatpush1.bf16.msra.mxu0 0
        %1158 = vmatprep.subr.bf16.mxu0 0
        %1159 = vmatpush1.bf16.msra.mxu0 0
        %1160 = vmatprep.subr.bf16.mxu0 0
        %1161 = vmatpush1.bf16.msra.mxu0 0
        %1162 = vmatprep.subr.bf16.mxu0 0
        %1163 = vmatpush1.bf16.msra.mxu0 0
        %1164 = vmatprep.subr.bf16.mxu0 0
        %1165 = vmatpush1.bf16.msra.mxu0 0
        %1166 = vmatprep.subr.bf16.mxu0 0
        %1167 = vmatpush1.bf16.msra.mxu0 0
        %1168 = vmatprep.subr.bf16.mxu0 0
        %1169 = vmatpush1.bf16.msra.mxu0 0
        %1170 = vmatprep.subr.bf16.mxu0 0
        %1171 = vmatpush1.bf16.msra.mxu0 0
        %1172 = vmatprep.subr.bf16.mxu0 0
        %1173 = vmatpush1.bf16.msra.mxu0 0
        %1174 = vmatprep.subr.bf16.mxu0 0
        %1175 = vmatpush1.bf16.msra.mxu0 0
        %1176 = vmatprep.subr.bf16.mxu0 0
        %1177 = vmatpush1.bf16.msra.mxu0 0
        %1178 = vmatprep.mubr.bf16.mxu0 0
        %1179 = vmatmul.mubr.bf16.gmra.mrb[0].mxu0 %v1141
        %v1180 = vpop.f32.mrb[0].mxu0
        %v1181 = vadd.f32 0.0, %v1180
        %v1182 = vpop.f32.mrb[0].mxu0
        %v1183 = vpop.f32.mrb[0].mxu0
        %v1184 = vpop.f32.mrb[0].mxu0
        %1185 = vdwg.mxu0
        %v1186 = vadd.f32 %v1138, %v1181
        %1187 = vst.msk [vmem:[#allocation2] sm:$0xff] %vm544, %v1186
        %1188 = vrot.lane.b32.xlu0 %v588, 104
        %v1189 = vpop.permute.xlu0 %1188
        %1190 = vrot.lane.b32.xlu0 %v648, 104
        %v1191 = vpop.permute.xlu0 %1190
        %v1193 = vsel %vm709, %v1189, 0
        %v1196 = vsel %vm709, %v1191, 0
        %1198 = vmatprep.subr.bf16.mxu0 0
        %1199 = vmatpush1.bf16.xpose.msra.mxu0 %v1196
        %1200 = vmatprep.subr.bf16.mxu0 0
        %1201 = vmatpush1.bf16.xpose.msra.mxu0 0
        %1202 = vmatprep.subr.bf16.mxu0 0
        %1203 = vmatpush1.bf16.xpose.msra.mxu0 0
        %1204 = vmatprep.subr.bf16.mxu0 0
        %1205 = vmatpush1.bf16.xpose.msra.mxu0 0
        %1206 = vmatprep.subr.bf16.mxu0 0
        %1207 = vmatpush1.bf16.xpose.msra.mxu0 0
        %1208 = vmatprep.subr.bf16.mxu0 0
        %1209 = vmatpush1.bf16.xpose.msra.mxu0 0
        %1210 = vmatprep.subr.bf16.mxu0 0
        %1211 = vmatpush1.bf16.xpose.msra.mxu0 0
        %1212 = vmatprep.subr.bf16.mxu0 0
        %1213 = vmatpush1.bf16.xpose.msra.mxu0 0
        %1214 = vmatprep.subr.bf16.mxu0 0
        %1215 = vmatpush1.bf16.xpose.msra.mxu0 0
        %1216 = vmatprep.subr.bf16.mxu0 0
        %1217 = vmatpush1.bf16.xpose.msra.mxu0 0
        %1218 = vmatprep.subr.bf16.mxu0 0
        %1219 = vmatpush1.bf16.xpose.msra.mxu0 0
        %1220 = vmatprep.subr.bf16.mxu0 0
        %1221 = vmatpush1.bf16.xpose.msra.mxu0 0
        %1222 = vmatprep.subr.bf16.mxu0 0
        %1223 = vmatpush1.bf16.xpose.msra.mxu0 0
        %1224 = vmatprep.subr.bf16.mxu0 0
        %1225 = vmatpush1.bf16.xpose.msra.mxu0 0
        %1226 = vmatprep.subr.bf16.mxu0 0
        %1227 = vmatpush1.bf16.xpose.msra.mxu0 0
        %1228 = vmatprep.subr.bf16.mxu0 0
        %1229 = vmatpush1.bf16.xpose.msra.mxu0 0
        %1230 = vmatprep.mubr.bf16.mxu0 0
        %1231 = vmatmul.mubr.bf16.gmra.mrb[0].mxu0 %v1193
        %v1232 = vpop.f32.mrb[0].mxu0
        %v1233 = vadd.f32 0.0, %v1232
        %v1234 = vpop.f32.mrb[0].mxu0
        %v1235 = vpop.f32.mrb[0].mxu0
        %v1236 = vpop.f32.mrb[0].mxu0
        %1237 = vdwg.mxu0
        %v1238 = vsel %vm709, %v1233, -inf
        %1239 = vmax.xlane.f32.xlu0 %v1238
        %v1240 = vpop.xlane.xlu0 %1239
        %v1241 = vsub.f32 %v1233, %v1240
        %v1242 = vmul.f32 %v1241, 1.442695
        %v1243 = vpow.pop %v1242
        %v1244 = vsel %vm709, %v1243, 0.0
        %1245 = vadd.xlane.f32.xlu0 %v1244
        %v1246 = vpop.xlane.xlu0 %1245
        %v1247 = vpack.c.bf16 %v1243, %v1243
        %1248 = vrot.lane.b32.xlu0 %v708, 104
        %v1249 = vpop.permute.xlu0 %1248
        %v1251 = vsel %vm709, %v1247, 0
        %v1254 = vsel %vm769, %v1249, 0
        %1256 = vmatprep.subr.bf16.mxu0 0
        %1257 = vmatpush1.bf16.msra.mxu0 %v1254
        %1258 = vmatprep.subr.bf16.mxu0 0
        %1259 = vmatpush1.bf16.msra.mxu0 0
        %1260 = vmatprep.subr.bf16.mxu0 0
        %1261 = vmatpush1.bf16.msra.mxu0 0
        %1262 = vmatprep.subr.bf16.mxu0 0
        %1263 = vmatpush1.bf16.msra.mxu0 0
        %1264 = vmatprep.subr.bf16.mxu0 0
        %1265 = vmatpush1.bf16.msra.mxu0 0
        %1266 = vmatprep.subr.bf16.mxu0 0
        %1267 = vmatpush1.bf16.msra.mxu0 0
        %1268 = vmatprep.subr.bf16.mxu0 0
        %1269 = vmatpush1.bf16.msra.mxu0 0
        %1270 = vmatprep.subr.bf16.mxu0 0
        %1271 = vmatpush1.bf16.msra.mxu0 0
        %1272 = vmatprep.subr.bf16.mxu0 0
        %1273 = vmatpush1.bf16.msra.mxu0 0
        %1274 = vmatprep.subr.bf16.mxu0 0
        %1275 = vmatpush1.bf16.msra.mxu0 0
        %1276 = vmatprep.subr.bf16.mxu0 0
        %1277 = vmatpush1.bf16.msra.mxu0 0
        %1278 = vmatprep.subr.bf16.mxu0 0
        %1279 = vmatpush1.bf16.msra.mxu0 0
        %1280 = vmatprep.subr.bf16.mxu0 0
        %1281 = vmatpush1.bf16.msra.mxu0 0
        %1282 = vmatprep.subr.bf16.mxu0 0
        %1283 = vmatpush1.bf16.msra.mxu0 0
        %1284 = vmatprep.subr.bf16.mxu0 0
        %1285 = vmatpush1.bf16.msra.mxu0 0
        %1286 = vmatprep.subr.bf16.mxu0 0
        %1287 = vmatpush1.bf16.msra.mxu0 0
        %1288 = vmatprep.mubr.bf16.mxu0 0
        %1289 = vmatmul.mubr.bf16.gmra.mrb[0].mxu0 %v1251
        %v1290 = vpop.f32.mrb[0].mxu0
        %v1291 = vadd.f32 0.0, %v1290
        %v1292 = vpop.f32.mrb[0].mxu0
        %v1293 = vpop.f32.mrb[0].mxu0
        %v1294 = vpop.f32.mrb[0].mxu0
        %1295 = vdwg.mxu0
        %v1296 = vrcp.pop %v1246
        %v1297 = vmul.f32 %v1291, %v1296
        %v1298 = vld [vmem:[#allocation2] sm:$0xff]
        %v1299 = vpack.c.bf16 %v1297, %v1297
        %v1301 = vsel %vm709, %v1299, 0
        %v1304 = vsel %vm769, %v523, 0
        %1306 = vmatprep.subr.bf16.mxu0 0
        %1307 = vmatpush1.bf16.msra.mxu0 %v1304
        %1308 = vmatprep.subr.bf16.mxu0 0
        %1309 = vmatpush1.bf16.msra.mxu0 0
        %1310 = vmatprep.subr.bf16.mxu0 0
        %1311 = vmatpush1.bf16.msra.mxu0 0
        %1312 = vmatprep.subr.bf16.mxu0 0
        %1313 = vmatpush1.bf16.msra.mxu0 0
        %1314 = vmatprep.subr.bf16.mxu0 0
        %1315 = vmatpush1.bf16.msra.mxu0 0
        %1316 = vmatprep.subr.bf16.mxu0 0
        %1317 = vmatpush1.bf16.msra.mxu0 0
        %1318 = vmatprep.subr.bf16.mxu0 0
        %1319 = vmatpush1.bf16.msra.mxu0 0
        %1320 = vmatprep.subr.bf16.mxu0 0
        %1321 = vmatpush1.bf16.msra.mxu0 0
        %1322 = vmatprep.subr.bf16.mxu0 0
        %1323 = vmatpush1.bf16.msra.mxu0 0
        %1324 = vmatprep.subr.bf16.mxu0 0
        %1325 = vmatpush1.bf16.msra.mxu0 0
        %1326 = vmatprep.subr.bf16.mxu0 0
        %1327 = vmatpush1.bf16.msra.mxu0 0
        %1328 = vmatprep.subr.bf16.mxu0 0
        %1329 = vmatpush1.bf16.msra.mxu0 0
        %1330 = vmatprep.subr.bf16.mxu0 0
        %1331 = vmatpush1.bf16.msra.mxu0 0
        %1332 = vmatprep.subr.bf16.mxu0 0
        %1333 = vmatpush1.bf16.msra.mxu0 0
        %1334 = vmatprep.subr.bf16.mxu0 0
        %1335 = vmatpush1.bf16.msra.mxu0 0
        %1336 = vmatprep.subr.bf16.mxu0 0
        %1337 = vmatpush1.bf16.msra.mxu0 0
        %1338 = vmatprep.mubr.bf16.mxu0 0
        %1339 = vmatmul.mubr.bf16.gmra.mrb[0].mxu0 %v1301
        %v1340 = vpop.f32.mrb[0].mxu0
        %v1341 = vadd.f32 0.0, %v1340
        %v1342 = vpop.f32.mrb[0].mxu0
        %v1343 = vpop.f32.mrb[0].mxu0
        %v1344 = vpop.f32.mrb[0].mxu0
        %1345 = vdwg.mxu0
        %v1346 = vadd.f32 %v1298, %v1341
        %1347 = vst.msk [vmem:[#allocation2] sm:$0xff] %vm544, %v1346
        // Predicated region
        $region81: #{tpu_custom_call.1} parent=55 // pred_check
          %p1348 = pneg %p502
        $region82: #{tpu_custom_call.1} parent=55 // pred_check_branch
          %1350 = sbr.rel (%p1348) target = $region84
        $region83: #{tpu_custom_call.1} parent=55 // pred_region
          %v1351 = vld [vmem:[#allocation2] sm:$0xff]
          %v1352 = vld [vmem:[%s8] sm:$0x1]
          %v1354 = vlaneseq
          %v1355 = vshrl.u32 %v1354, 7
          %v1356 = vsub.s32 0, %v1355
          %v1357 = vrot.slane %v1352, %v1356
          %v1359 = vadd.f32 %v1351, %v1357
          %1360 = vst.msk [vmem:[%s491] sm:$0xff] %vm544, %v1359
        $region84: #{tpu_custom_call.1} parent=55 // pred_fallthru
          _
        %s1361 = sand.u32 %s286, 1
        %s1362 = scalar_lea.sflag [#allocation5], %s1361
        %s1363 = sand.u32 %s286, 1
        %s1364 = smul.addr %s1363, 8
        %s1365 = scalar_lea.vmem [#allocation12], %s1364
        // Predicated region
        $region85: #{tpu_custom_call.1} parent=55 // pred_check
          %p1366 = pneg %p296
        $region86: #{tpu_custom_call.1} parent=55 // pred_check_branch
          %1368 = sbr.rel (%p1366) target = $region88
        $region87: #{tpu_custom_call.1} parent=55 // pred_region
          %s1370 = ssub.s32 128, 128
          %1371 = vsyncadd %s1362, %s1370
          %s1372 = sadd.s32 %s34, %s33
          %s1373 = smul.addr %s1372, 128
          %s1374 = scalar_lea.hbm %s9, %s1373
          %s1376 = sshll.u32 %s1365, 4
          %s1377 = int_to_ptr.vmem [resolvable:$true] %s1376
          %1379 = dma.vmem_to_hbm [thread:$0]  %s1377, 128, %s1374, %s1362
        $region88: #{tpu_custom_call.1} parent=55 // pred_fallthru
          _
      $region56: #{tpu_custom_call.1} parent=5 // pred_fallthru
        _
      %p1380 = scmp.le.s32.totalorder 2, %s23
      // Predicated region
      $region89: #{tpu_custom_call.1} parent=5 // pred_check
        %p1381 = pneg %p1380
      $region90: #{tpu_custom_call.1} parent=5 // pred_check_branch
        %1383 = sbr.rel (%p1381) target = $region92
      $region91: #{tpu_custom_call.1} parent=5 // pred_region
        %s1384 = ssub.s32 %s23, 2
        // Predicated region
        $region93: #{tpu_custom_call.1} parent=91 // pred_check
          %p1385 = pneg %p302
        $region94: #{tpu_custom_call.1} parent=91 // pred_check_branch
          %1387 = sbr.rel (%p1385) target = $region96
        $region95: #{tpu_custom_call.1} parent=91 // pred_region
          %s1388 = sand.u32 %s287, 1
          %s1389 = scalar_lea.sflag [#allocation5], %s1388
          %s1390 = sand.u32 %s287, 1
          %s1391 = smul.addr %s1390, 8
          %s1392 = scalar_lea.vmem [#allocation12], %s1391
          %1393 = dma.done %s1389, 128
        $region96: #{tpu_custom_call.1} parent=91 // pred_fallthru
          _
      $region92: #{tpu_custom_call.1} parent=5 // pred_fallthru
        _
    $region6: #{tpu_custom_call.1} parent=1 // loop_footer
      %s27 = sadd.s32 1, %s23
    $region7: #{tpu_custom_call.1} parent=1 // loop_footer_branch
      %22 = sbr.rel target = $region3
    $region8: #{tpu_custom_call.1} parent=1 // loop_exit
      _
    %1394 = vsyncpa [#allocation4], 1
    %s1395 = scalar_lea.sflag [#allocation4], 1
    %1396 = vsyncpa %s1395, 1
    %1397 = vsyncpa [#allocation7], 1
    %1398 = vsyncpa [#allocation10], 1
    %1399 = vsyncpa [#allocation5], 1
    %s1400 = scalar_lea.sflag [#allocation5], 1
    %1401 = vsyncpa %s1400, 1

</llo_original>
